<compile_context>
chip_gen: v7x
topology: tpu7x:2x2x1
jax: 0.10.0
libtpu: 0.0.40
codegen_flags: <defaults>
</compile_context>

<pallas_src>
import jax
import jax.numpy as jnp
from jax import lax
from jax.experimental import pallas as pl
from jax.experimental.pallas import tpu as pltpu


def _round_up(x, m):
    return ((x + m - 1) // m) * m


def _perm_ifgo_to_ifog(w):
    """Permute trailing 4H gate columns from torch (i,f,g,o) to (i,f,o,g)."""
    h = w.shape[-1] // 4
    return jnp.concatenate([w[..., :2 * h], w[..., 3 * h:], w[..., 2 * h:3 * h]],
                           axis=-1)


def _interleave_block(ws, wp):
    """Build a block weight (Ks+Kp, 8H) from per-stream (K, 4H) weights.

    Output gate-column layout (each H wide):
        [i_s, i_p, f_s, f_p, o_s, o_p, g_s, g_p]
    Rows 0:Ks only feed the *_s columns, rows Ks: only feed the *_p columns,
    so a single matmul against [h_seq | h_pep] (or a two-hot token row)
    computes both streams with no per-step masking.
    """
    ks, g4 = ws.shape
    kp = wp.shape[0]
    h = g4 // 4
    ws_g = ws.reshape(ks, 4, h)
    wp_g = wp.reshape(kp, 4, h)
    top = jnp.concatenate([ws_g, jnp.zeros((ks, 4, h), ws.dtype)], axis=2)
    bot = jnp.concatenate([jnp.zeros((kp, 4, h), wp.dtype), wp_g], axis=2)
    return jnp.concatenate([top, bot], axis=0).reshape(ks + kp, 8 * h)


def double_lstm_kernel(tok_seq_ref, tok_pep_ref, lens2_ref, gate_blk_ref,
                       whh_blk_ref, w1_ref, b1_ref, w2_ref, b2_ref,
                       out_ref, xg_ref):
    """Fused double-LSTM recurrence + MLP head.

    tok_seq_ref : (T, Bp)  i32   sequence token ids (0 = padding)
    tok_pep_ref : (T, Bp)  i32   peptide token ids
    lens2_ref   : (Bp, 2H) i32   per-row lengths broadcast over the seq / pep
                                 halves of the feature axis
    gate_blk_ref: (Kv, 8H) bf16  block-stacked (emb @ W_ih + b) gate table,
                                 rows [0:Kv/2) = seq vocab, [Kv/2:Kv) = pep
    whh_blk_ref : (2H, 8H) bf16  block-diagonal recurrent weight
    w1/b1/w2/b2 :                lane-padded MLP head (W^T layout)
    out_ref     : (Bp, D2p) f32  sigmoid scores (padding sliced in wrapper)
    xg_ref      : (T, Bp, 8H) f32 VMEM scratch for the input gates
    """
    T, Bp = tok_seq_ref.shape
    G8 = whh_blk_ref.shape[1]          # 8H
    H2 = G8 // 4                       # 2H
    H6 = 3 * H2                        # width of the sigmoid (i|f|o) block
    Kv = gate_blk_ref.shape[0]
    Vhalf = Kv // 2

    # ---- Phase 1 (off the serial chain): fused input projection.
    # Two-hot encode both token streams into disjoint lane ranges and hit the
    # block-stacked gate table with one MXU matmul.  Bias is folded into the
    # table rows, padding token 0 selects the (zero-embedding + bias) row.
    ts = tok_seq_ref[...]
    tp = tok_pep_ref[...]
    lane = lax.broadcasted_iota(jnp.int32, (T, Bp, Kv), 2)
    tok_lane = jnp.where(lane < Vhalf, ts[:, :, None], tp[:, :, None] + Vhalf)
    onehot = jnp.where(lane == tok_lane, 1.0, 0.0)                  # (T,Bp,Kv) f32
    xg = jnp.dot(onehot.reshape(T * Bp, Kv).astype(jnp.bfloat16),
                 gate_blk_ref[...],
                 preferred_element_type=jnp.float32)                # (T*Bp, 8H)
    xg_ref[...] = xg.reshape(T, Bp, G8)

    # ---- Phase 2: serial recurrence, both streams fused in one matmul.
    lens2 = lens2_ref[...]                                          # (Bp, 2H)
    whh = whh_blk_ref[...]                                          # loop-invariant

    def step(t, carry):
        h, c, last = carry                                          # (Bp, 2H) f32
        gates = (jnp.dot(h.astype(jnp.bfloat16), whh,
                         preferred_element_type=jnp.float32)
                 + xg_ref[t])                                       # (Bp, 8H)
        sig = jax.nn.sigmoid(gates[:, :H6])                         # i|f|o in one pass
        g = jnp.tanh(gates[:, H6:])                                 # g in one pass
        i = sig[:, :H2]
        f = sig[:, H2:2 * H2]
        o = sig[:, 2 * H2:]
        c = f * c + i * g
        h = o * jnp.tanh(c)
        last = jnp.where(lens2 == (t + 1), h, last)                 # capture at len-1
        return h, c, last

    z = jnp.zeros((Bp, H2), jnp.float32)
    # Short static trip count -> fully unroll so the scheduler sees the whole
    # recurrence and overlaps off-chain loads with the serial matmul chain.
    _, _, last = lax.fori_loop(0, T, step, (z, z, z), unroll=True)

    # ---- Phase 3: MLP head.  `last` is already [h_seq | h_pep] == torch.cat.
    l1 = (jnp.dot(last.astype(jnp.bfloat16), w1_ref[...],
                  preferred_element_type=jnp.float32) + b1_ref[...])
    l1 = jnp.where(l1 >= 0, l1, 0.01 * l1)                          # LeakyReLU(0.01)
    score = (jnp.dot(l1.astype(jnp.bfloat16), w2_ref[...],
                     preferred_element_type=jnp.float32) + b2_ref[...])
    out_ref[...] = jax.nn.sigmoid(score)                            # F.sigmoid


def double_lstm_classifier(inputs, sequences_len, input_pep, peptides_len, params):
    """inputs: (T_seq, B) int32, input_pep: (T_pep, B) int32, lengths: (B,).

    Note: lengths must satisfy 1 <= len <= T (PyTorch pack_padded_sequence
    would reject zero-length rows); real rows with len 0 would return zeros.
    """
    T_seq, B = inputs.shape
    T_pep = input_pep.shape[0]
    T = max(T_seq, T_pep)
    Bp = _round_up(max(B, 8), 8)                       # full-sublane rows
    H = params["whh_s"].shape[0]
    D1 = params["w1"].shape[1]                         # hidden_dim // 2
    tagset = params["w2"].shape[1]
    D1p = _round_up(D1, 128)
    D2p = _round_up(tagset, 128)
    V = params["emb_seq"].shape[0]
    V2 = params["emb_pep"].shape[0]
    Vhalf = max(_round_up(max(V, V2), 8), 64)          # lanes per vocab half
    Kv = 2 * Vhalf
    assert V <= Vhalf and V2 <= Vhalf

    # Token ids padded in time to a common T and in batch to Bp (token 0 =
    # padding; padded steps/rows never affect the captured last-hidden).
    tok_seq = jnp.pad(inputs.astype(jnp.int32), ((0, T - T_seq), (0, Bp - B)))
    tok_pep = jnp.pad(input_pep.astype(jnp.int32), ((0, T - T_pep), (0, Bp - B)))

    # Per-row lengths broadcast over each stream's half of the feature axis.
    sl = jnp.pad(sequences_len.astype(jnp.int32), (0, Bp - B))
    plen = jnp.pad(peptides_len.astype(jnp.int32), (0, Bp - B))
    lens2 = jnp.concatenate(
        [jnp.broadcast_to(sl[:, None], (Bp, H)),
         jnp.broadcast_to(plen[:, None], (Bp, H))], axis=1)          # (Bp, 2H)

    # Fold  embedding -> x @ W_ih -> + (b_ih + b_hh)  into per-token gate
    # tables, permute gates to (i,f,o,g) and block-stack seq/pep.
    gts = _perm_ifgo_to_ifog(params["emb_seq"] @ params["wih_s"] + params["b_s"])
    gtp = _perm_ifgo_to_ifog(params["emb_pep"] @ params["wih_p"] + params["b_p"])
    gts = jnp.pad(gts, ((0, Vhalf - V), (0, 0)))
    gtp = jnp.pad(gtp, ((0, Vhalf - V2), (0, 0)))
    gate_blk = _interleave_block(gts, gtp).astype(jnp.bfloat16)      # (Kv, 8H)

    # Block-diagonal recurrent weight built once, for free, in the wrapper.
    whh_blk = _interleave_block(_perm_ifgo_to_ifog(params["whh_s"]),
                                _perm_ifgo_to_ifog(params["whh_p"])
                                ).astype(jnp.bfloat16)               # (2H, 8H)

    # Lane-dense MLP head (zero-padded to 128 output lanes).
    w1 = jnp.pad(params["w1"], ((0, 0), (0, D1p - D1))).astype(jnp.bfloat16)
    b1 = jnp.pad(params["b1"], ((0, 0), (0, D1p - D1))).astype(jnp.float32)
    w2 = jnp.pad(params["w2"],
                 ((0, D1p - D1), (0, D2p - tagset))).astype(jnp.bfloat16)
    b2 = jnp.pad(params["b2"], ((0, 0), (0, D2p - tagset))).astype(jnp.float32)

    args = (tok_seq, tok_pep, lens2, gate_blk, whh_blk, w1, b1, w2, b2)
    vmem = pl.BlockSpec(memory_space=pltpu.MemorySpace.VMEM)

    # TODO(synk): at production T/B, stream tokens over a time grid axis
    # ("arbitrary") and shard batch rows across v7x's two TensorCores via a
    # leading "parallel" axis; re-derive buffer sizes against 64 MiB VMEM.
    out_padded = pl.pallas_call(
        double_lstm_kernel,
        out_shape=jax.ShapeDtypeStruct((Bp, D2p), jnp.float32),
        in_specs=[vmem] * len(args),
        out_specs=vmem,
        scratch_shapes=[pltpu.VMEM((T, Bp, 8 * H), jnp.float32)],
        compiler_params=pltpu.CompilerParams(vmem_limit_bytes=32 * 1024 * 1024),
    )(*args)
    return out_padded[:B, :tagset]


def init_params(key, embedding_dim, hidden_dim, vocab_size, tagset_size, vocab_size2):
    E, H = embedding_dim, hidden_dim
    ks = jax.random.split(key, 12)

    def nrm(k, shape, scale=0.1):
        return (scale * jax.random.normal(k, shape)).astype(jnp.float32)

    emb_seq = nrm(ks[0], (vocab_size, E)).at[0].set(0.0)    # padding_idx=0
    emb_pep = nrm(ks[1], (vocab_size2, E)).at[0].set(0.0)   # padding_idx=0

    # nn.LSTM params stored transposed: W_ih^T (E, 4H), W_hh^T (H, 4H),
    # torch gate column order (i, f, g, o); the two biases pre-summed.
    wih_s = nrm(ks[2], (E, 4 * H)); whh_s = nrm(ks[3], (H, 4 * H)); b_s = nrm(ks[4], (1, 4 * H))
    wih_p = nrm(ks[5], (E, 4 * H)); whh_p = nrm(ks[6], (H, 4 * H)); b_p = nrm(ks[7], (1, 4 * H))

    # hidden1: Linear(2H -> H//2), stored as W^T; rows 0:H act on the seq
    # hidden, rows H:2H on the pep hidden (matches torch.cat order).
    w1 = nrm(ks[8], (2 * H, H // 2))
    b1 = nrm(ks[9], (1, H // 2))

    # hidden2tag: Linear(H//2 -> tagset), stored as W^T.
    w2 = nrm(ks[10], (H // 2, tagset_size))
    b2 = nrm(ks[11], (1, tagset_size))

    return dict(emb_seq=emb_seq, emb_pep=emb_pep,
                wih_s=wih_s, whh_s=whh_s, b_s=b_s,
                wih_p=wih_p, whh_p=whh_p, b_p=b_p,
                w1=w1, b1=b1, w2=w2, b2=b2)


if __name__ == "__main__":
    # Small shapes consistent with the module.
    E, H = 16, 32
    vocab_size, vocab_size2 = 22, 22
    tagset_size = 2
    B = 4
    T_seq, T_pep = 12, 8

    key = jax.random.PRNGKey(0)
    pkey, k1, k2 = jax.random.split(key, 3)
    params = init_params(pkey, E, H, vocab_size, tagset_size, vocab_size2)

    # Lengths sorted descending (pack_padded_sequence enforce_sorted semantics).
    sequences_len = jnp.array([12, 10, 7, 5], dtype=jnp.int32)
    peptides_len = jnp.array([8, 8, 6, 4], dtype=jnp.int32)

    inputs = jax.random.randint(k1, (T_seq, B), 1, vocab_size).astype(jnp.int32)
    input_pep = jax.random.randint(k2, (T_pep, B), 1, vocab_size2).astype(jnp.int32)
    # Zero (padding token) beyond each sequence's length.
    inputs = jnp.where(jnp.arange(T_seq)[:, None] < sequences_len[None, :], inputs, 0)
    input_pep = jnp.where(jnp.arange(T_pep)[:, None] < peptides_len[None, :], input_pep, 0)

    out = double_lstm_classifier(inputs, sequences_len, input_pep, peptides_len, params)
    out = jax.block_until_ready(out)
    assert out.shape == (B, tagset_size) and out.dtype == jnp.float32
    assert bool(jnp.all(jnp.isfinite(out)))
    assert bool(jnp.all((out >= 0.0) & (out <= 1.0)))
    print("KERNEL_OK")
</pallas_src>

<mosaic_0001>
module attributes {stable_mosaic.version = 11 : i64} {
  func.func @double_lstm_kernel(%arg0: memref<12x8xi32, #tpu.memory_space<vmem>>, %arg1: memref<12x8xi32, #tpu.memory_space<vmem>>, %arg2: memref<8x64xi32, #tpu.memory_space<vmem>>, %arg3: memref<128x256xbf16, #tpu.memory_space<vmem>>, %arg4: memref<64x256xbf16, #tpu.memory_space<vmem>>, %arg5: memref<64x128xbf16, #tpu.memory_space<vmem>>, %arg6: memref<1x128xf32, #tpu.memory_space<vmem>>, %arg7: memref<128x128xbf16, #tpu.memory_space<vmem>>, %arg8: memref<1x128xf32, #tpu.memory_space<vmem>>, %arg9: memref<8x128xf32, #tpu.memory_space<vmem>>, %arg10: memref<12x8x256xf32, #tpu.memory_space<vmem>>) attributes {dimension_semantics = [], scalar_prefetch = 0 : i64, scratch_operands = 1 : i64, tpu.core_type = #tpu.core_type<tc>} {
    %c0 = arith.constant 0 : index
    %c0_0 = arith.constant 0 : index
    %0 = vector.load %arg0[%c0, %c0_0] : memref<12x8xi32, #tpu.memory_space<vmem>>, vector<12x8xi32>
    %c0_1 = arith.constant 0 : index
    %c0_2 = arith.constant 0 : index
    %1 = vector.load %arg1[%c0_1, %c0_2] : memref<12x8xi32, #tpu.memory_space<vmem>>, vector<12x8xi32>
    %2 = tpu.iota {dimensions = array<i32: 2>} : vector<12x8x128xi32>
    %c64_i32 = arith.constant 64 : i32
    %3 = vector.broadcast %c64_i32 : i32 to vector<12x8x128xi32>
    %4 = arith.cmpi slt, %2, %3 : vector<12x8x128xi32>
    %5 = vector.shape_cast %0 : vector<12x8xi32> to vector<12x8x1xi32>
    %6 = vector.shape_cast %1 : vector<12x8xi32> to vector<12x8x1xi32>
    %c64_i32_3 = arith.constant 64 : i32
    %7 = vector.broadcast %c64_i32_3 : i32 to vector<12x8x1xi32>
    %8 = arith.addi %6, %7 : vector<12x8x1xi32>
    %9 = vector.shape_cast %5 : vector<12x8x1xi32> to vector<12x8x1xi32>
    %10 = vector.broadcast %9 : vector<12x8x1xi32> to vector<12x8x128xi32>
    %11 = vector.shape_cast %8 : vector<12x8x1xi32> to vector<12x8x1xi32>
    %12 = vector.broadcast %11 : vector<12x8x1xi32> to vector<12x8x128xi32>
    %13 = arith.select %4, %10, %12 : vector<12x8x128xi1>, vector<12x8x128xi32>
    %14 = arith.cmpi eq, %2, %13 : vector<12x8x128xi32>
    %cst = arith.constant 1.000000e+00 : f32
    %cst_4 = arith.constant 0.000000e+00 : f32
    %15 = vector.broadcast %cst : f32 to vector<12x8x128xf32>
    %16 = vector.broadcast %cst_4 : f32 to vector<12x8x128xf32>
    %17 = arith.select %14, %15, %16 : vector<12x8x128xi1>, vector<12x8x128xf32>
    %18 = vector.shape_cast %17 : vector<12x8x128xf32> to vector<96x128xf32>
    %19 = arith.truncf %18 : vector<96x128xf32> to vector<96x128xbf16>
    %c0_5 = arith.constant 0 : index
    %c0_6 = arith.constant 0 : index
    %20 = vector.load %arg3[%c0_5, %c0_6] : memref<128x256xbf16, #tpu.memory_space<vmem>>, vector<128x256xbf16>
    %cst_7 = arith.constant dense<0.000000e+00> : vector<96x256xf32>
    %21 = tpu.matmul %19, %20, %cst_7 {dimension_numbers = #tpu.dot_dimension_numbers<[1], [0], [0], [1], [0, 0, 1, 1], [], []>} : vector<96x128xbf16>, vector<128x256xbf16>, vector<96x256xf32> -> vector<96x256xf32>
    %22 = vector.shape_cast %21 : vector<96x256xf32> to vector<12x8x256xf32>
    %c0_8 = arith.constant 0 : index
    %c0_9 = arith.constant 0 : index
    %c0_10 = arith.constant 0 : index
    %23 = vector.load %arg10[%c0_8, %c0_9, %c0_10] : memref<12x8x256xf32, #tpu.memory_space<vmem>>, vector<12x8x256xf32>
    tpu.vector_store %arg10[%c0_8, %c0_9, %c0_10], %22 {strides = array<i32>} : memref<12x8x256xf32, #tpu.memory_space<vmem>>, vector<12x8x256xf32>,
    %c0_11 = arith.constant 0 : index
    %c0_12 = arith.constant 0 : index
    %24 = vector.load %arg2[%c0_11, %c0_12] : memref<8x64xi32, #tpu.memory_space<vmem>>, vector<8x64xi32>
    %c0_13 = arith.constant 0 : index
    %c0_14 = arith.constant 0 : index
    %25 = vector.load %arg4[%c0_13, %c0_14] : memref<64x256xbf16, #tpu.memory_space<vmem>>, vector<64x256xbf16>
    %cst_15 = arith.constant 0.000000e+00 : f32
    %26 = vector.broadcast %cst_15 : f32 to vector<8x64xf32>
    %c0_i32 = arith.constant 0 : i32
    %27 = arith.truncf %26 : vector<8x64xf32> to vector<8x64xbf16>
    %cst_16 = arith.constant dense<0.000000e+00> : vector<8x256xf32>
    %28 = tpu.matmul %27, %25, %cst_16 {dimension_numbers = #tpu.dot_dimension_numbers<[1], [0], [0], [1], [0, 0, 1, 1], [], []>} : vector<8x64xbf16>, vector<64x256xbf16>, vector<8x256xf32> -> vector<8x256xf32>
    %29 = arith.index_cast %c0_i32 : i32 to index
    %c0_17 = arith.constant 0 : index
    %c0_18 = arith.constant 0 : index
    %30 = vector.load %arg10[%29, %c0_17, %c0_18] : memref<12x8x256xf32, #tpu.memory_space<vmem>>, vector<1x8x256xf32>
    %31 = vector.shape_cast %30 : vector<1x8x256xf32> to vector<8x256xf32>
    %32 = arith.addf %28, %31 : vector<8x256xf32>
    %33 = vector.extract_strided_slice %32 {offsets = [0, 0], sizes = [8, 192], strides = [1, 1]} : vector<8x256xf32> to vector<8x192xf32>
    %34 = arith.negf %33 : vector<8x192xf32>
    %35 = math.exp %34 : vector<8x192xf32>
    %cst_19 = arith.constant 1.000000e+00 : f32
    %36 = vector.broadcast %cst_19 : f32 to vector<8x192xf32>
    %37 = arith.addf %36, %35 : vector<8x192xf32>
    %38 = arith.divf %36, %37 : vector<8x192xf32>
    %39 = vector.extract_strided_slice %32 {offsets = [0, 192], sizes = [8, 64], strides = [1, 1]} : vector<8x256xf32> to vector<8x64xf32>
    %40 = math.tanh %39 : vector<8x64xf32>
    %41 = vector.extract_strided_slice %38 {offsets = [0, 0], sizes = [8, 64], strides = [1, 1]} : vector<8x192xf32> to vector<8x64xf32>
    %42 = vector.extract_strided_slice %38 {offsets = [0, 64], sizes = [8, 64], strides = [1, 1]} : vector<8x192xf32> to vector<8x64xf32>
    %43 = vector.extract_strided_slice %38 {offsets = [0, 128], sizes = [8, 64], strides = [1, 1]} : vector<8x192xf32> to vector<8x64xf32>
    %44 = arith.mulf %42, %26 : vector<8x64xf32>
    %45 = arith.mulf %41, %40 : vector<8x64xf32>
    %46 = arith.addf %44, %45 : vector<8x64xf32>
    %47 = math.tanh %46 : vector<8x64xf32>
    %48 = arith.mulf %43, %47 : vector<8x64xf32>
    %c1_i32 = arith.constant 1 : i32
    %49 = arith.addi %c0_i32, %c1_i32 : i32
    %50 = vector.broadcast %49 : i32 to vector<8x64xi32>
    %51 = arith.cmpi eq, %24, %50 : vector<8x64xi32>
    %52 = arith.select %51, %48, %26 : vector<8x64xi1>, vector<8x64xf32>
    %c1_i32_20 = arith.constant 1 : i32
    %53 = arith.truncf %48 : vector<8x64xf32> to vector<8x64xbf16>
    %cst_21 = arith.constant dense<0.000000e+00> : vector<8x256xf32>
    %54 = tpu.matmul %53, %25, %cst_21 {dimension_numbers = #tpu.dot_dimension_numbers<[1], [0], [0], [1], [0, 0, 1, 1], [], []>} : vector<8x64xbf16>, vector<64x256xbf16>, vector<8x256xf32> -> vector<8x256xf32>
    %55 = arith.index_cast %c1_i32_20 : i32 to index
    %c0_22 = arith.constant 0 : index
    %c0_23 = arith.constant 0 : index
    %56 = vector.load %arg10[%55, %c0_22, %c0_23] : memref<12x8x256xf32, #tpu.memory_space<vmem>>, vector<1x8x256xf32>
    %57 = vector.shape_cast %56 : vector<1x8x256xf32> to vector<8x256xf32>
    %58 = arith.addf %54, %57 : vector<8x256xf32>
    %59 = vector.extract_strided_slice %58 {offsets = [0, 0], sizes = [8, 192], strides = [1, 1]} : vector<8x256xf32> to vector<8x192xf32>
    %60 = arith.negf %59 : vector<8x192xf32>
    %61 = math.exp %60 : vector<8x192xf32>
    %cst_24 = arith.constant 1.000000e+00 : f32
    %62 = vector.broadcast %cst_24 : f32 to vector<8x192xf32>
    %63 = arith.addf %62, %61 : vector<8x192xf32>
    %64 = arith.divf %62, %63 : vector<8x192xf32>
    %65 = vector.extract_strided_slice %58 {offsets = [0, 192], sizes = [8, 64], strides = [1, 1]} : vector<8x256xf32> to vector<8x64xf32>
    %66 = math.tanh %65 : vector<8x64xf32>
    %67 = vector.extract_strided_slice %64 {offsets = [0, 0], sizes = [8, 64], strides = [1, 1]} : vector<8x192xf32> to vector<8x64xf32>
    %68 = vector.extract_strided_slice %64 {offsets = [0, 64], sizes = [8, 64], strides = [1, 1]} : vector<8x192xf32> to vector<8x64xf32>
    %69 = vector.extract_strided_slice %64 {offsets = [0, 128], sizes = [8, 64], strides = [1, 1]} : vector<8x192xf32> to vector<8x64xf32>
    %70 = arith.mulf %68, %46 : vector<8x64xf32>
    %71 = arith.mulf %67, %66 : vector<8x64xf32>
    %72 = arith.addf %70, %71 : vector<8x64xf32>
    %73 = math.tanh %72 : vector<8x64xf32>
    %74 = arith.mulf %69, %73 : vector<8x64xf32>
    %c1_i32_25 = arith.constant 1 : i32
    %75 = arith.addi %c1_i32_20, %c1_i32_25 : i32
    %76 = vector.broadcast %75 : i32 to vector<8x64xi32>
    %77 = arith.cmpi eq, %24, %76 : vector<8x64xi32>
    %78 = arith.select %77, %74, %52 : vector<8x64xi1>, vector<8x64xf32>
    %c2_i32 = arith.constant 2 : i32
    %79 = arith.truncf %74 : vector<8x64xf32> to vector<8x64xbf16>
    %cst_26 = arith.constant dense<0.000000e+00> : vector<8x256xf32>
    %80 = tpu.matmul %79, %25, %cst_26 {dimension_numbers = #tpu.dot_dimension_numbers<[1], [0], [0], [1], [0, 0, 1, 1], [], []>} : vector<8x64xbf16>, vector<64x256xbf16>, vector<8x256xf32> -> vector<8x256xf32>
    %81 = arith.index_cast %c2_i32 : i32 to index
    %c0_27 = arith.constant 0 : index
    %c0_28 = arith.constant 0 : index
    %82 = vector.load %arg10[%81, %c0_27, %c0_28] : memref<12x8x256xf32, #tpu.memory_space<vmem>>, vector<1x8x256xf32>
    %83 = vector.shape_cast %82 : vector<1x8x256xf32> to vector<8x256xf32>
    %84 = arith.addf %80, %83 : vector<8x256xf32>
    %85 = vector.extract_strided_slice %84 {offsets = [0, 0], sizes = [8, 192], strides = [1, 1]} : vector<8x256xf32> to vector<8x192xf32>
    %86 = arith.negf %85 : vector<8x192xf32>
    %87 = math.exp %86 : vector<8x192xf32>
    %cst_29 = arith.constant 1.000000e+00 : f32
    %88 = vector.broadcast %cst_29 : f32 to vector<8x192xf32>
    %89 = arith.addf %88, %87 : vector<8x192xf32>
    %90 = arith.divf %88, %89 : vector<8x192xf32>
    %91 = vector.extract_strided_slice %84 {offsets = [0, 192], sizes = [8, 64], strides = [1, 1]} : vector<8x256xf32> to vector<8x64xf32>
    %92 = math.tanh %91 : vector<8x64xf32>
    %93 = vector.extract_strided_slice %90 {offsets = [0, 0], sizes = [8, 64], strides = [1, 1]} : vector<8x192xf32> to vector<8x64xf32>
    %94 = vector.extract_strided_slice %90 {offsets = [0, 64], sizes = [8, 64], strides = [1, 1]} : vector<8x192xf32> to vector<8x64xf32>
    %95 = vector.extract_strided_slice %90 {offsets = [0, 128], sizes = [8, 64], strides = [1, 1]} : vector<8x192xf32> to vector<8x64xf32>
    %96 = arith.mulf %94, %72 : vector<8x64xf32>
    %97 = arith.mulf %93, %92 : vector<8x64xf32>
    %98 = arith.addf %96, %97 : vector<8x64xf32>
    %99 = math.tanh %98 : vector<8x64xf32>
    %100 = arith.mulf %95, %99 : vector<8x64xf32>
    %c1_i32_30 = arith.constant 1 : i32
    %101 = arith.addi %c2_i32, %c1_i32_30 : i32
    %102 = vector.broadcast %101 : i32 to vector<8x64xi32>
    %103 = arith.cmpi eq, %24, %102 : vector<8x64xi32>
    %104 = arith.select %103, %100, %78 : vector<8x64xi1>, vector<8x64xf32>
    %c3_i32 = arith.constant 3 : i32
    %105 = arith.truncf %100 : vector<8x64xf32> to vector<8x64xbf16>
    %cst_31 = arith.constant dense<0.000000e+00> : vector<8x256xf32>
    %106 = tpu.matmul %105, %25, %cst_31 {dimension_numbers = #tpu.dot_dimension_numbers<[1], [0], [0], [1], [0, 0, 1, 1], [], []>} : vector<8x64xbf16>, vector<64x256xbf16>, vector<8x256xf32> -> vector<8x256xf32>
    %107 = arith.index_cast %c3_i32 : i32 to index
    %c0_32 = arith.constant 0 : index
    %c0_33 = arith.constant 0 : index
    %108 = vector.load %arg10[%107, %c0_32, %c0_33] : memref<12x8x256xf32, #tpu.memory_space<vmem>>, vector<1x8x256xf32>
    %109 = vector.shape_cast %108 : vector<1x8x256xf32> to vector<8x256xf32>
    %110 = arith.addf %106, %109 : vector<8x256xf32>
    %111 = vector.extract_strided_slice %110 {offsets = [0, 0], sizes = [8, 192], strides = [1, 1]} : vector<8x256xf32> to vector<8x192xf32>
    %112 = arith.negf %111 : vector<8x192xf32>
    %113 = math.exp %112 : vector<8x192xf32>
    %cst_34 = arith.constant 1.000000e+00 : f32
    %114 = vector.broadcast %cst_34 : f32 to vector<8x192xf32>
    %115 = arith.addf %114, %113 : vector<8x192xf32>
    %116 = arith.divf %114, %115 : vector<8x192xf32>
    %117 = vector.extract_strided_slice %110 {offsets = [0, 192], sizes = [8, 64], strides = [1, 1]} : vector<8x256xf32> to vector<8x64xf32>
    %118 = math.tanh %117 : vector<8x64xf32>
    %119 = vector.extract_strided_slice %116 {offsets = [0, 0], sizes = [8, 64], strides = [1, 1]} : vector<8x192xf32> to vector<8x64xf32>
    %120 = vector.extract_strided_slice %116 {offsets = [0, 64], sizes = [8, 64], strides = [1, 1]} : vector<8x192xf32> to vector<8x64xf32>
    %121 = vector.extract_strided_slice %116 {offsets = [0, 128], sizes = [8, 64], strides = [1, 1]} : vector<8x192xf32> to vector<8x64xf32>
    %122 = arith.mulf %120, %98 : vector<8x64xf32>
    %123 = arith.mulf %119, %118 : vector<8x64xf32>
    %124 = arith.addf %122, %123 : vector<8x64xf32>
    %125 = math.tanh %124 : vector<8x64xf32>
    %126 = arith.mulf %121, %125 : vector<8x64xf32>
    %c1_i32_35 = arith.constant 1 : i32
    %127 = arith.addi %c3_i32, %c1_i32_35 : i32
    %128 = vector.broadcast %127 : i32 to vector<8x64xi32>
    %129 = arith.cmpi eq, %24, %128 : vector<8x64xi32>
    %130 = arith.select %129, %126, %104 : vector<8x64xi1>, vector<8x64xf32>
    %c4_i32 = arith.constant 4 : i32
    %131 = arith.truncf %126 : vector<8x64xf32> to vector<8x64xbf16>
    %cst_36 = arith.constant dense<0.000000e+00> : vector<8x256xf32>
    %132 = tpu.matmul %131, %25, %cst_36 {dimension_numbers = #tpu.dot_dimension_numbers<[1], [0], [0], [1], [0, 0, 1, 1], [], []>} : vector<8x64xbf16>, vector<64x256xbf16>, vector<8x256xf32> -> vector<8x256xf32>
    %133 = arith.index_cast %c4_i32 : i32 to index
    %c0_37 = arith.constant 0 : index
    %c0_38 = arith.constant 0 : index
    %134 = vector.load %arg10[%133, %c0_37, %c0_38] : memref<12x8x256xf32, #tpu.memory_space<vmem>>, vector<1x8x256xf32>
    %135 = vector.shape_cast %134 : vector<1x8x256xf32> to vector<8x256xf32>
    %136 = arith.addf %132, %135 : vector<8x256xf32>
    %137 = vector.extract_strided_slice %136 {offsets = [0, 0], sizes = [8, 192], strides = [1, 1]} : vector<8x256xf32> to vector<8x192xf32>
    %138 = arith.negf %137 : vector<8x192xf32>
    %139 = math.exp %138 : vector<8x192xf32>
    %cst_39 = arith.constant 1.000000e+00 : f32
    %140 = vector.broadcast %cst_39 : f32 to vector<8x192xf32>
    %141 = arith.addf %140, %139 : vector<8x192xf32>
    %142 = arith.divf %140, %141 : vector<8x192xf32>
    %143 = vector.extract_strided_slice %136 {offsets = [0, 192], sizes = [8, 64], strides = [1, 1]} : vector<8x256xf32> to vector<8x64xf32>
    %144 = math.tanh %143 : vector<8x64xf32>
    %145 = vector.extract_strided_slice %142 {offsets = [0, 0], sizes = [8, 64], strides = [1, 1]} : vector<8x192xf32> to vector<8x64xf32>
    %146 = vector.extract_strided_slice %142 {offsets = [0, 64], sizes = [8, 64], strides = [1, 1]} : vector<8x192xf32> to vector<8x64xf32>
    %147 = vector.extract_strided_slice %142 {offsets = [0, 128], sizes = [8, 64], strides = [1, 1]} : vector<8x192xf32> to vector<8x64xf32>
    %148 = arith.mulf %146, %124 : vector<8x64xf32>
    %149 = arith.mulf %145, %144 : vector<8x64xf32>
    %150 = arith.addf %148, %149 : vector<8x64xf32>
    %151 = math.tanh %150 : vector<8x64xf32>
    %152 = arith.mulf %147, %151 : vector<8x64xf32>
    %c1_i32_40 = arith.constant 1 : i32
    %153 = arith.addi %c4_i32, %c1_i32_40 : i32
    %154 = vector.broadcast %153 : i32 to vector<8x64xi32>
    %155 = arith.cmpi eq, %24, %154 : vector<8x64xi32>
    %156 = arith.select %155, %152, %130 : vector<8x64xi1>, vector<8x64xf32>
    %c5_i32 = arith.constant 5 : i32
    %157 = arith.truncf %152 : vector<8x64xf32> to vector<8x64xbf16>
    %cst_41 = arith.constant dense<0.000000e+00> : vector<8x256xf32>
    %158 = tpu.matmul %157, %25, %cst_41 {dimension_numbers = #tpu.dot_dimension_numbers<[1], [0], [0], [1], [0, 0, 1, 1], [], []>} : vector<8x64xbf16>, vector<64x256xbf16>, vector<8x256xf32> -> vector<8x256xf32>
    %159 = arith.index_cast %c5_i32 : i32 to index
    %c0_42 = arith.constant 0 : index
    %c0_43 = arith.constant 0 : index
    %160 = vector.load %arg10[%159, %c0_42, %c0_43] : memref<12x8x256xf32, #tpu.memory_space<vmem>>, vector<1x8x256xf32>
    %161 = vector.shape_cast %160 : vector<1x8x256xf32> to vector<8x256xf32>
    %162 = arith.addf %158, %161 : vector<8x256xf32>
    %163 = vector.extract_strided_slice %162 {offsets = [0, 0], sizes = [8, 192], strides = [1, 1]} : vector<8x256xf32> to vector<8x192xf32>
    %164 = arith.negf %163 : vector<8x192xf32>
    %165 = math.exp %164 : vector<8x192xf32>
    %cst_44 = arith.constant 1.000000e+00 : f32
    %166 = vector.broadcast %cst_44 : f32 to vector<8x192xf32>
    %167 = arith.addf %166, %165 : vector<8x192xf32>
    %168 = arith.divf %166, %167 : vector<8x192xf32>
    %169 = vector.extract_strided_slice %162 {offsets = [0, 192], sizes = [8, 64], strides = [1, 1]} : vector<8x256xf32> to vector<8x64xf32>
    %170 = math.tanh %169 : vector<8x64xf32>
    %171 = vector.extract_strided_slice %168 {offsets = [0, 0], sizes = [8, 64], strides = [1, 1]} : vector<8x192xf32> to vector<8x64xf32>
    %172 = vector.extract_strided_slice %168 {offsets = [0, 64], sizes = [8, 64], strides = [1, 1]} : vector<8x192xf32> to vector<8x64xf32>
    %173 = vector.extract_strided_slice %168 {offsets = [0, 128], sizes = [8, 64], strides = [1, 1]} : vector<8x192xf32> to vector<8x64xf32>
    %174 = arith.mulf %172, %150 : vector<8x64xf32>
    %175 = arith.mulf %171, %170 : vector<8x64xf32>
    %176 = arith.addf %174, %175 : vector<8x64xf32>
    %177 = math.tanh %176 : vector<8x64xf32>
    %178 = arith.mulf %173, %177 : vector<8x64xf32>
    %c1_i32_45 = arith.constant 1 : i32
    %179 = arith.addi %c5_i32, %c1_i32_45 : i32
    %180 = vector.broadcast %179 : i32 to vector<8x64xi32>
    %181 = arith.cmpi eq, %24, %180 : vector<8x64xi32>
    %182 = arith.select %181, %178, %156 : vector<8x64xi1>, vector<8x64xf32>
    %c6_i32 = arith.constant 6 : i32
    %183 = arith.truncf %178 : vector<8x64xf32> to vector<8x64xbf16>
    %cst_46 = arith.constant dense<0.000000e+00> : vector<8x256xf32>
    %184 = tpu.matmul %183, %25, %cst_46 {dimension_numbers = #tpu.dot_dimension_numbers<[1], [0], [0], [1], [0, 0, 1, 1], [], []>} : vector<8x64xbf16>, vector<64x256xbf16>, vector<8x256xf32> -> vector<8x256xf32>
    %185 = arith.index_cast %c6_i32 : i32 to index
    %c0_47 = arith.constant 0 : index
    %c0_48 = arith.constant 0 : index
    %186 = vector.load %arg10[%185, %c0_47, %c0_48] : memref<12x8x256xf32, #tpu.memory_space<vmem>>, vector<1x8x256xf32>
    %187 = vector.shape_cast %186 : vector<1x8x256xf32> to vector<8x256xf32>
    %188 = arith.addf %184, %187 : vector<8x256xf32>
    %189 = vector.extract_strided_slice %188 {offsets = [0, 0], sizes = [8, 192], strides = [1, 1]} : vector<8x256xf32> to vector<8x192xf32>
    %190 = arith.negf %189 : vector<8x192xf32>
    %191 = math.exp %190 : vector<8x192xf32>
    %cst_49 = arith.constant 1.000000e+00 : f32
    %192 = vector.broadcast %cst_49 : f32 to vector<8x192xf32>
    %193 = arith.addf %192, %191 : vector<8x192xf32>
    %194 = arith.divf %192, %193 : vector<8x192xf32>
    %195 = vector.extract_strided_slice %188 {offsets = [0, 192], sizes = [8, 64], strides = [1, 1]} : vector<8x256xf32> to vector<8x64xf32>
    %196 = math.tanh %195 : vector<8x64xf32>
    %197 = vector.extract_strided_slice %194 {offsets = [0, 0], sizes = [8, 64], strides = [1, 1]} : vector<8x192xf32> to vector<8x64xf32>
    %198 = vector.extract_strided_slice %194 {offsets = [0, 64], sizes = [8, 64], strides = [1, 1]} : vector<8x192xf32> to vector<8x64xf32>
    %199 = vector.extract_strided_slice %194 {offsets = [0, 128], sizes = [8, 64], strides = [1, 1]} : vector<8x192xf32> to vector<8x64xf32>
    %200 = arith.mulf %198, %176 : vector<8x64xf32>
    %201 = arith.mulf %197, %196 : vector<8x64xf32>
    %202 = arith.addf %200, %201 : vector<8x64xf32>
    %203 = math.tanh %202 : vector<8x64xf32>
    %204 = arith.mulf %199, %203 : vector<8x64xf32>
    %c1_i32_50 = arith.constant 1 : i32
    %205 = arith.addi %c6_i32, %c1_i32_50 : i32
    %206 = vector.broadcast %205 : i32 to vector<8x64xi32>
    %207 = arith.cmpi eq, %24, %206 : vector<8x64xi32>
    %208 = arith.select %207, %204, %182 : vector<8x64xi1>, vector<8x64xf32>
    %c7_i32 = arith.constant 7 : i32
    %209 = arith.truncf %204 : vector<8x64xf32> to vector<8x64xbf16>
    %cst_51 = arith.constant dense<0.000000e+00> : vector<8x256xf32>
    %210 = tpu.matmul %209, %25, %cst_51 {dimension_numbers = #tpu.dot_dimension_numbers<[1], [0], [0], [1], [0, 0, 1, 1], [], []>} : vector<8x64xbf16>, vector<64x256xbf16>, vector<8x256xf32> -> vector<8x256xf32>
    %211 = arith.index_cast %c7_i32 : i32 to index
    %c0_52 = arith.constant 0 : index
    %c0_53 = arith.constant 0 : index
    %212 = vector.load %arg10[%211, %c0_52, %c0_53] : memref<12x8x256xf32, #tpu.memory_space<vmem>>, vector<1x8x256xf32>
    %213 = vector.shape_cast %212 : vector<1x8x256xf32> to vector<8x256xf32>
    %214 = arith.addf %210, %213 : vector<8x256xf32>
    %215 = vector.extract_strided_slice %214 {offsets = [0, 0], sizes = [8, 192], strides = [1, 1]} : vector<8x256xf32> to vector<8x192xf32>
    %216 = arith.negf %215 : vector<8x192xf32>
    %217 = math.exp %216 : vector<8x192xf32>
    %cst_54 = arith.constant 1.000000e+00 : f32
    %218 = vector.broadcast %cst_54 : f32 to vector<8x192xf32>
    %219 = arith.addf %218, %217 : vector<8x192xf32>
    %220 = arith.divf %218, %219 : vector<8x192xf32>
    %221 = vector.extract_strided_slice %214 {offsets = [0, 192], sizes = [8, 64], strides = [1, 1]} : vector<8x256xf32> to vector<8x64xf32>
    %222 = math.tanh %221 : vector<8x64xf32>
    %223 = vector.extract_strided_slice %220 {offsets = [0, 0], sizes = [8, 64], strides = [1, 1]} : vector<8x192xf32> to vector<8x64xf32>
    %224 = vector.extract_strided_slice %220 {offsets = [0, 64], sizes = [8, 64], strides = [1, 1]} : vector<8x192xf32> to vector<8x64xf32>
    %225 = vector.extract_strided_slice %220 {offsets = [0, 128], sizes = [8, 64], strides = [1, 1]} : vector<8x192xf32> to vector<8x64xf32>
    %226 = arith.mulf %224, %202 : vector<8x64xf32>
    %227 = arith.mulf %223, %222 : vector<8x64xf32>
    %228 = arith.addf %226, %227 : vector<8x64xf32>
    %229 = math.tanh %228 : vector<8x64xf32>
    %230 = arith.mulf %225, %229 : vector<8x64xf32>
    %c1_i32_55 = arith.constant 1 : i32
    %231 = arith.addi %c7_i32, %c1_i32_55 : i32
    %232 = vector.broadcast %231 : i32 to vector<8x64xi32>
    %233 = arith.cmpi eq, %24, %232 : vector<8x64xi32>
    %234 = arith.select %233, %230, %208 : vector<8x64xi1>, vector<8x64xf32>
    %c8_i32 = arith.constant 8 : i32
    %235 = arith.truncf %230 : vector<8x64xf32> to vector<8x64xbf16>
    %cst_56 = arith.constant dense<0.000000e+00> : vector<8x256xf32>
    %236 = tpu.matmul %235, %25, %cst_56 {dimension_numbers = #tpu.dot_dimension_numbers<[1], [0], [0], [1], [0, 0, 1, 1], [], []>} : vector<8x64xbf16>, vector<64x256xbf16>, vector<8x256xf32> -> vector<8x256xf32>
    %237 = arith.index_cast %c8_i32 : i32 to index
    %c0_57 = arith.constant 0 : index
    %c0_58 = arith.constant 0 : index
    %238 = vector.load %arg10[%237, %c0_57, %c0_58] : memref<12x8x256xf32, #tpu.memory_space<vmem>>, vector<1x8x256xf32>
    %239 = vector.shape_cast %238 : vector<1x8x256xf32> to vector<8x256xf32>
    %240 = arith.addf %236, %239 : vector<8x256xf32>
    %241 = vector.extract_strided_slice %240 {offsets = [0, 0], sizes = [8, 192], strides = [1, 1]} : vector<8x256xf32> to vector<8x192xf32>
    %242 = arith.negf %241 : vector<8x192xf32>
    %243 = math.exp %242 : vector<8x192xf32>
    %cst_59 = arith.constant 1.000000e+00 : f32
    %244 = vector.broadcast %cst_59 : f32 to vector<8x192xf32>
    %245 = arith.addf %244, %243 : vector<8x192xf32>
    %246 = arith.divf %244, %245 : vector<8x192xf32>
    %247 = vector.extract_strided_slice %240 {offsets = [0, 192], sizes = [8, 64], strides = [1, 1]} : vector<8x256xf32> to vector<8x64xf32>
    %248 = math.tanh %247 : vector<8x64xf32>
    %249 = vector.extract_strided_slice %246 {offsets = [0, 0], sizes = [8, 64], strides = [1, 1]} : vector<8x192xf32> to vector<8x64xf32>
    %250 = vector.extract_strided_slice %246 {offsets = [0, 64], sizes = [8, 64], strides = [1, 1]} : vector<8x192xf32> to vector<8x64xf32>
    %251 = vector.extract_strided_slice %246 {offsets = [0, 128], sizes = [8, 64], strides = [1, 1]} : vector<8x192xf32> to vector<8x64xf32>
    %252 = arith.mulf %250, %228 : vector<8x64xf32>
    %253 = arith.mulf %249, %248 : vector<8x64xf32>
    %254 = arith.addf %252, %253 : vector<8x64xf32>
    %255 = math.tanh %254 : vector<8x64xf32>
    %256 = arith.mulf %251, %255 : vector<8x64xf32>
    %c1_i32_60 = arith.constant 1 : i32
    %257 = arith.addi %c8_i32, %c1_i32_60 : i32
    %258 = vector.broadcast %257 : i32 to vector<8x64xi32>
    %259 = arith.cmpi eq, %24, %258 : vector<8x64xi32>
    %260 = arith.select %259, %256, %234 : vector<8x64xi1>, vector<8x64xf32>
    %c9_i32 = arith.constant 9 : i32
    %261 = arith.truncf %256 : vector<8x64xf32> to vector<8x64xbf16>
    %cst_61 = arith.constant dense<0.000000e+00> : vector<8x256xf32>
    %262 = tpu.matmul %261, %25, %cst_61 {dimension_numbers = #tpu.dot_dimension_numbers<[1], [0], [0], [1], [0, 0, 1, 1], [], []>} : vector<8x64xbf16>, vector<64x256xbf16>, vector<8x256xf32> -> vector<8x256xf32>
    %263 = arith.index_cast %c9_i32 : i32 to index
    %c0_62 = arith.constant 0 : index
    %c0_63 = arith.constant 0 : index
    %264 = vector.load %arg10[%263, %c0_62, %c0_63] : memref<12x8x256xf32, #tpu.memory_space<vmem>>, vector<1x8x256xf32>
    %265 = vector.shape_cast %264 : vector<1x8x256xf32> to vector<8x256xf32>
    %266 = arith.addf %262, %265 : vector<8x256xf32>
    %267 = vector.extract_strided_slice %266 {offsets = [0, 0], sizes = [8, 192], strides = [1, 1]} : vector<8x256xf32> to vector<8x192xf32>
    %268 = arith.negf %267 : vector<8x192xf32>
    %269 = math.exp %268 : vector<8x192xf32>
    %cst_64 = arith.constant 1.000000e+00 : f32
    %270 = vector.broadcast %cst_64 : f32 to vector<8x192xf32>
    %271 = arith.addf %270, %269 : vector<8x192xf32>
    %272 = arith.divf %270, %271 : vector<8x192xf32>
    %273 = vector.extract_strided_slice %266 {offsets = [0, 192], sizes = [8, 64], strides = [1, 1]} : vector<8x256xf32> to vector<8x64xf32>
    %274 = math.tanh %273 : vector<8x64xf32>
    %275 = vector.extract_strided_slice %272 {offsets = [0, 0], sizes = [8, 64], strides = [1, 1]} : vector<8x192xf32> to vector<8x64xf32>
    %276 = vector.extract_strided_slice %272 {offsets = [0, 64], sizes = [8, 64], strides = [1, 1]} : vector<8x192xf32> to vector<8x64xf32>
    %277 = vector.extract_strided_slice %272 {offsets = [0, 128], sizes = [8, 64], strides = [1, 1]} : vector<8x192xf32> to vector<8x64xf32>
    %278 = arith.mulf %276, %254 : vector<8x64xf32>
    %279 = arith.mulf %275, %274 : vector<8x64xf32>
    %280 = arith.addf %278, %279 : vector<8x64xf32>
    %281 = math.tanh %280 : vector<8x64xf32>
    %282 = arith.mulf %277, %281 : vector<8x64xf32>
    %c1_i32_65 = arith.constant 1 : i32
    %283 = arith.addi %c9_i32, %c1_i32_65 : i32
    %284 = vector.broadcast %283 : i32 to vector<8x64xi32>
    %285 = arith.cmpi eq, %24, %284 : vector<8x64xi32>
    %286 = arith.select %285, %282, %260 : vector<8x64xi1>, vector<8x64xf32>
    %c10_i32 = arith.constant 10 : i32
    %287 = arith.truncf %282 : vector<8x64xf32> to vector<8x64xbf16>
    %cst_66 = arith.constant dense<0.000000e+00> : vector<8x256xf32>
    %288 = tpu.matmul %287, %25, %cst_66 {dimension_numbers = #tpu.dot_dimension_numbers<[1], [0], [0], [1], [0, 0, 1, 1], [], []>} : vector<8x64xbf16>, vector<64x256xbf16>, vector<8x256xf32> -> vector<8x256xf32>
    %289 = arith.index_cast %c10_i32 : i32 to index
    %c0_67 = arith.constant 0 : index
    %c0_68 = arith.constant 0 : index
    %290 = vector.load %arg10[%289, %c0_67, %c0_68] : memref<12x8x256xf32, #tpu.memory_space<vmem>>, vector<1x8x256xf32>
    %291 = vector.shape_cast %290 : vector<1x8x256xf32> to vector<8x256xf32>
    %292 = arith.addf %288, %291 : vector<8x256xf32>
    %293 = vector.extract_strided_slice %292 {offsets = [0, 0], sizes = [8, 192], strides = [1, 1]} : vector<8x256xf32> to vector<8x192xf32>
    %294 = arith.negf %293 : vector<8x192xf32>
    %295 = math.exp %294 : vector<8x192xf32>
    %cst_69 = arith.constant 1.000000e+00 : f32
    %296 = vector.broadcast %cst_69 : f32 to vector<8x192xf32>
    %297 = arith.addf %296, %295 : vector<8x192xf32>
    %298 = arith.divf %296, %297 : vector<8x192xf32>
    %299 = vector.extract_strided_slice %292 {offsets = [0, 192], sizes = [8, 64], strides = [1, 1]} : vector<8x256xf32> to vector<8x64xf32>
    %300 = math.tanh %299 : vector<8x64xf32>
    %301 = vector.extract_strided_slice %298 {offsets = [0, 0], sizes = [8, 64], strides = [1, 1]} : vector<8x192xf32> to vector<8x64xf32>
    %302 = vector.extract_strided_slice %298 {offsets = [0, 64], sizes = [8, 64], strides = [1, 1]} : vector<8x192xf32> to vector<8x64xf32>
    %303 = vector.extract_strided_slice %298 {offsets = [0, 128], sizes = [8, 64], strides = [1, 1]} : vector<8x192xf32> to vector<8x64xf32>
    %304 = arith.mulf %302, %280 : vector<8x64xf32>
    %305 = arith.mulf %301, %300 : vector<8x64xf32>
    %306 = arith.addf %304, %305 : vector<8x64xf32>
    %307 = math.tanh %306 : vector<8x64xf32>
    %308 = arith.mulf %303, %307 : vector<8x64xf32>
    %c1_i32_70 = arith.constant 1 : i32
    %309 = arith.addi %c10_i32, %c1_i32_70 : i32
    %310 = vector.broadcast %309 : i32 to vector<8x64xi32>
    %311 = arith.cmpi eq, %24, %310 : vector<8x64xi32>
    %312 = arith.select %311, %308, %286 : vector<8x64xi1>, vector<8x64xf32>
    %c11_i32 = arith.constant 11 : i32
    %313 = arith.truncf %308 : vector<8x64xf32> to vector<8x64xbf16>
    %cst_71 = arith.constant dense<0.000000e+00> : vector<8x256xf32>
    %314 = tpu.matmul %313, %25, %cst_71 {dimension_numbers = #tpu.dot_dimension_numbers<[1], [0], [0], [1], [0, 0, 1, 1], [], []>} : vector<8x64xbf16>, vector<64x256xbf16>, vector<8x256xf32> -> vector<8x256xf32>
    %315 = arith.index_cast %c11_i32 : i32 to index
    %c0_72 = arith.constant 0 : index
    %c0_73 = arith.constant 0 : index
    %316 = vector.load %arg10[%315, %c0_72, %c0_73] : memref<12x8x256xf32, #tpu.memory_space<vmem>>, vector<1x8x256xf32>
    %317 = vector.shape_cast %316 : vector<1x8x256xf32> to vector<8x256xf32>
    %318 = arith.addf %314, %317 : vector<8x256xf32>
    %319 = vector.extract_strided_slice %318 {offsets = [0, 0], sizes = [8, 192], strides = [1, 1]} : vector<8x256xf32> to vector<8x192xf32>
    %320 = arith.negf %319 : vector<8x192xf32>
    %321 = math.exp %320 : vector<8x192xf32>
    %cst_74 = arith.constant 1.000000e+00 : f32
    %322 = vector.broadcast %cst_74 : f32 to vector<8x192xf32>
    %323 = arith.addf %322, %321 : vector<8x192xf32>
    %324 = arith.divf %322, %323 : vector<8x192xf32>
    %325 = vector.extract_strided_slice %318 {offsets = [0, 192], sizes = [8, 64], strides = [1, 1]} : vector<8x256xf32> to vector<8x64xf32>
    %326 = math.tanh %325 : vector<8x64xf32>
    %327 = vector.extract_strided_slice %324 {offsets = [0, 0], sizes = [8, 64], strides = [1, 1]} : vector<8x192xf32> to vector<8x64xf32>
    %328 = vector.extract_strided_slice %324 {offsets = [0, 64], sizes = [8, 64], strides = [1, 1]} : vector<8x192xf32> to vector<8x64xf32>
    %329 = vector.extract_strided_slice %324 {offsets = [0, 128], sizes = [8, 64], strides = [1, 1]} : vector<8x192xf32> to vector<8x64xf32>
    %330 = arith.mulf %328, %306 : vector<8x64xf32>
    %331 = arith.mulf %327, %326 : vector<8x64xf32>
    %332 = arith.addf %330, %331 : vector<8x64xf32>
    %333 = math.tanh %332 : vector<8x64xf32>
    %334 = arith.mulf %329, %333 : vector<8x64xf32>
    %c1_i32_75 = arith.constant 1 : i32
    %335 = arith.addi %c11_i32, %c1_i32_75 : i32
    %336 = vector.broadcast %335 : i32 to vector<8x64xi32>
    %337 = arith.cmpi eq, %24, %336 : vector<8x64xi32>
    %338 = arith.select %337, %334, %312 : vector<8x64xi1>, vector<8x64xf32>
    %c12_i32 = arith.constant 12 : i32
    %339 = arith.truncf %338 : vector<8x64xf32> to vector<8x64xbf16>
    %c0_76 = arith.constant 0 : index
    %c0_77 = arith.constant 0 : index
    %340 = vector.load %arg5[%c0_76, %c0_77] : memref<64x128xbf16, #tpu.memory_space<vmem>>, vector<64x128xbf16>
    %cst_78 = arith.constant dense<0.000000e+00> : vector<8x128xf32>
    %341 = tpu.matmul %339, %340, %cst_78 {dimension_numbers = #tpu.dot_dimension_numbers<[1], [0], [0], [1], [0, 0, 1, 1], [], []>} : vector<8x64xbf16>, vector<64x128xbf16>, vector<8x128xf32> -> vector<8x128xf32>
    %c0_79 = arith.constant 0 : index
    %c0_80 = arith.constant 0 : index
    %342 = vector.load %arg6[%c0_79, %c0_80] : memref<1x128xf32, #tpu.memory_space<vmem>>, vector<1x128xf32>
    %343 = vector.broadcast %342 : vector<1x128xf32> to vector<8x128xf32>
    %344 = arith.addf %341, %343 : vector<8x128xf32>
    %cst_81 = arith.constant 0.000000e+00 : f32
    %345 = vector.broadcast %cst_81 : f32 to vector<8x128xf32>
    %346 = arith.cmpf oge, %344, %345 : vector<8x128xf32>
    %cst_82 = arith.constant 0.00999999977 : f32
    %347 = vector.broadcast %cst_82 : f32 to vector<8x128xf32>
    %348 = arith.mulf %347, %344 : vector<8x128xf32>
    %349 = arith.select %346, %344, %348 : vector<8x128xi1>, vector<8x128xf32>
    %350 = arith.truncf %349 : vector<8x128xf32> to vector<8x128xbf16>
    %c0_83 = arith.constant 0 : index
    %c0_84 = arith.constant 0 : index
    %351 = vector.load %arg7[%c0_83, %c0_84] : memref<128x128xbf16, #tpu.memory_space<vmem>>, vector<128x128xbf16>
    %cst_85 = arith.constant dense<0.000000e+00> : vector<8x128xf32>
    %352 = tpu.matmul %350, %351, %cst_85 {dimension_numbers = #tpu.dot_dimension_numbers<[1], [0], [0], [1], [0, 0, 1, 1], [], []>} : vector<8x128xbf16>, vector<128x128xbf16>, vector<8x128xf32> -> vector<8x128xf32>
    %c0_86 = arith.constant 0 : index
    %c0_87 = arith.constant 0 : index
    %353 = vector.load %arg8[%c0_86, %c0_87] : memref<1x128xf32, #tpu.memory_space<vmem>>, vector<1x128xf32>
    %354 = vector.broadcast %353 : vector<1x128xf32> to vector<8x128xf32>
    %355 = arith.addf %352, %354 : vector<8x128xf32>
    %356 = arith.negf %355 : vector<8x128xf32>
    %357 = math.exp %356 : vector<8x128xf32>
    %cst_88 = arith.constant 1.000000e+00 : f32
    %358 = vector.broadcast %cst_88 : f32 to vector<8x128xf32>
    %359 = arith.addf %358, %357 : vector<8x128xf32>
    %360 = arith.divf %358, %359 : vector<8x128xf32>
    %c0_89 = arith.constant 0 : index
    %c0_90 = arith.constant 0 : index
    %361 = vector.load %arg9[%c0_89, %c0_90] : memref<8x128xf32, #tpu.memory_space<vmem>>, vector<8x128xf32>
    tpu.vector_store %arg9[%c0_89, %c0_90], %360 {strides = array<i32>} : memref<8x128xf32, #tpu.memory_space<vmem>>, vector<8x128xf32>,
    return
  }
}

</mosaic_0001>

<llo_original>
// kernel: tpu_custom_call.1
$region0: #{tpu_custom_call.1}
  #allocation0 [shape = 'u32[]', space=smem, size = 0x4, offset = 0x4, fixed_abs, tag = 'smem constant byte address 0x4 - core index']
  #allocation1 [shape = 'u32[144,128]{1,0:T(1,128)}', space=vmem, size = 0x12000, scoped, tag = 'internal scratch']
  #allocation2 [shape = 'f32[12,8,256]{2,1,0:T(8,128)}', space=vmem, size = 0x18000, scoped, tag = 'scratch operand']
  %s0 = inlined_call_operand.vmem [shape: s32[12,8], index: 0, kind: input, shape index: {}]
  %s1 = inlined_call_operand.vmem [shape: s32[12,8], index: 1, kind: input, shape index: {}]
  %s2 = inlined_call_operand.vmem [shape: s32[8,64], index: 2, kind: input, shape index: {}]
  %s3 = inlined_call_operand.hbm [shape: bf16[128,256], index: 3, kind: input, shape index: {}]
  %s4 = inlined_call_operand.hbm [shape: bf16[64,256], index: 4, kind: input, shape index: {}]
  %s5 = inlined_call_operand.hbm [shape: bf16[64,128], index: 5, kind: input, shape index: {}]
  %s6 = inlined_call_operand.vmem [shape: f32[1,128], index: 6, kind: input, shape index: {}]
  %s7 = inlined_call_operand.vmem [shape: bf16[128,128], index: 7, kind: input, shape index: {}]
  %s8 = inlined_call_operand.vmem [shape: f32[1,128], index: 8, kind: input, shape index: {}]
  %s9 = inlined_call_operand.hbm [shape: f32[8,128], index: 9, kind: output, shape index: {}]
  %s10 = sld [smem:[#allocation0]]
  $region58: #{tpu_custom_call.1} parent=0
    _
  %s12 = ssub.s32 1, %s10
  %s13 = scalar_select 0, %s12, %s10
  $region1: #{tpu_custom_call.1} parent=0
    #allocation3 [shape = 'u8[65536]{0}', space=vmem, size = 0x10000, scoped, tag = 'input window, operand 3, single buffered']
    #allocation4 [shape = 's32[1]{0}', space=sflag, size = 0x4, scoped, tag = 'scoped memory for tpu_custom_call.1']
    #allocation5 [shape = 's32[1]{0}', space=sflag, size = 0x4, scoped, tag = 'scoped memory for tpu_custom_call.1']
    #allocation6 [shape = 'u8[32768]{0}', space=vmem, size = 0x8000, scoped, tag = 'input window, operand 4, single buffered']
    #allocation7 [shape = 's32[1]{0}', space=sflag, size = 0x4, scoped, tag = 'scoped memory for tpu_custom_call.1']
    #allocation8 [shape = 'u8[16384]{0}', space=vmem, size = 0x4000, scoped, tag = 'input window, operand 5, single buffered']
    #allocation9 [shape = 'u8[4096]{0}', space=vmem, size = 0x1000, scoped, tag = 'output window, operand 0, single buffered']
    %14 = vsyncpa [#allocation4], 0
    %15 = vsyncpa [#allocation7], 0
    %16 = vsyncpa [#allocation5], 0
    // Predicated region
    $region2: #{tpu_custom_call.1} parent=1 // pred_check
      _
    $region3: #{tpu_custom_call.1} parent=1 // pred_check_branch
      %18 = sbr.rel (0) target = $region5
    $region4: #{tpu_custom_call.1} parent=1 // pred_region
      _
    $region5: #{tpu_custom_call.1} parent=1 // pred_fallthru
      _
    // Predicated region
    $region6: #{tpu_custom_call.1} parent=1 // pred_check
      _
    $region7: #{tpu_custom_call.1} parent=1 // pred_check_branch
      %20 = sbr.rel (0) target = $region9
    $region8: #{tpu_custom_call.1} parent=1 // pred_region
      _
    $region9: #{tpu_custom_call.1} parent=1 // pred_fallthru
      _
    // Predicated region
    $region10: #{tpu_custom_call.1} parent=1 // pred_check
      _
    $region11: #{tpu_custom_call.1} parent=1 // pred_check_branch
      %22 = sbr.rel (0) target = $region13
    $region12: #{tpu_custom_call.1} parent=1 // pred_region
      _
    $region13: #{tpu_custom_call.1} parent=1 // pred_fallthru
      _
    // Predicated region
    $region14: #{tpu_custom_call.1} parent=1 // pred_check
      _
    $region15: #{tpu_custom_call.1} parent=1 // pred_check_branch
      %24 = sbr.rel (0) target = $region17
    $region16: #{tpu_custom_call.1} parent=1 // pred_region
      %s26 = ssub.s32 2048, 2048
      %27 = vsyncadd [#allocation4], %s26
      %s28 = sshll.u32 [#allocation3], 4
      %s29 = int_to_ptr.vmem [resolvable:$true] %s28
      %34 = dma.hbm_to_vmem [thread:$0]  %s3, 2048, %s29, [#allocation4], 128, 128, 8
    $region17: #{tpu_custom_call.1} parent=1 // pred_fallthru
      _
    // Predicated region
    $region18: #{tpu_custom_call.1} parent=1 // pred_check
      _
    $region19: #{tpu_custom_call.1} parent=1 // pred_check_branch
      %36 = sbr.rel (0) target = $region21
    $region20: #{tpu_custom_call.1} parent=1 // pred_region
      %s38 = ssub.s32 1024, 1024
      %39 = vsyncadd [#allocation7], %s38
      %s40 = sshll.u32 [#allocation6], 4
      %s41 = int_to_ptr.vmem [resolvable:$true] %s40
      %46 = dma.hbm_to_vmem [thread:$0]  %s4, 1024, %s41, [#allocation7], 128, 128, 8
    $region21: #{tpu_custom_call.1} parent=1 // pred_fallthru
      _
    // Predicated region
    $region22: #{tpu_custom_call.1} parent=1 // pred_check
      _
    $region23: #{tpu_custom_call.1} parent=1 // pred_check_branch
      %48 = sbr.rel (0) target = $region25
    $region24: #{tpu_custom_call.1} parent=1 // pred_region
      %s50 = ssub.s32 512, 512
      %51 = vsyncadd [#allocation7], %s50
      %s52 = sshll.u32 [#allocation8], 4
      %s53 = int_to_ptr.vmem [resolvable:$true] %s52
      %58 = dma.hbm_to_vmem [thread:$0]  %s5, 512, %s53, [#allocation7], 64, 64, 4
    $region25: #{tpu_custom_call.1} parent=1 // pred_fallthru
      _
    // Predicated region
    $region26: #{tpu_custom_call.1} parent=1 // pred_check
      _
    $region27: #{tpu_custom_call.1} parent=1 // pred_check_branch
      %60 = sbr.rel (0) target = $region29
    $region28: #{tpu_custom_call.1} parent=1 // pred_region
      _
    $region29: #{tpu_custom_call.1} parent=1 // pred_fallthru
      _
    // Predicated region
    $region30: #{tpu_custom_call.1} parent=1 // pred_check
      _
    $region31: #{tpu_custom_call.1} parent=1 // pred_check_branch
      %62 = sbr.rel (0) target = $region33
    $region32: #{tpu_custom_call.1} parent=1 // pred_region
      _
    $region33: #{tpu_custom_call.1} parent=1 // pred_fallthru
      _
    // Predicated region
    $region34: #{tpu_custom_call.1} parent=1 // pred_check
      _
    $region35: #{tpu_custom_call.1} parent=1 // pred_check_branch
      %64 = sbr.rel (0) target = $region37
    $region36: #{tpu_custom_call.1} parent=1 // pred_region
      _
    $region37: #{tpu_custom_call.1} parent=1 // pred_fallthru
      _
    // Predicated region
    $region38: #{tpu_custom_call.1} parent=1 // pred_check
      _
    $region39: #{tpu_custom_call.1} parent=1 // pred_check_branch
      %66 = sbr.rel (0) target = $region41
    $region40: #{tpu_custom_call.1} parent=1 // pred_region
      %67 = dma.done [#allocation4], 2048
    $region41: #{tpu_custom_call.1} parent=1 // pred_fallthru
      _
    // Predicated region
    $region42: #{tpu_custom_call.1} parent=1 // pred_check
      _
    $region43: #{tpu_custom_call.1} parent=1 // pred_check_branch
      %69 = sbr.rel (0) target = $region45
    $region44: #{tpu_custom_call.1} parent=1 // pred_region
      %70 = dma.done [#allocation7], 1024
    $region45: #{tpu_custom_call.1} parent=1 // pred_fallthru
      _
    // Predicated region
    $region46: #{tpu_custom_call.1} parent=1 // pred_check
      _
    $region47: #{tpu_custom_call.1} parent=1 // pred_check_branch
      %72 = sbr.rel (0) target = $region49
    $region48: #{tpu_custom_call.1} parent=1 // pred_region
      %73 = dma.done [#allocation7], 512
    $region49: #{tpu_custom_call.1} parent=1 // pred_fallthru
      _
    %v75 = vld [vmem:[%s0] sm:$0xff]
    %v76 = vld [vmem:[%s0 + $0x8] sm:$0xf]
    %v77 = vld [vmem:[%s1] sm:$0xff]
    %v78 = vld [vmem:[%s1 + $0x8] sm:$0xf]
    %v79 = vlaneseq
    %v80 = vand.u32 %v79, 127
    %vm81 = vcmp.lt.s32.totalorder %v80, 64
    %v82 = vlaneseq
    %v83 = vshrl.u32 %v82, 7
    %v84 = vsub.s32 0, %v83
    %v85 = vrot.slane %v75, %v84
    %87 = vbcast.lane.b32.xlu0 %v85, 256
    %v88 = vpop.permute.xlu0 %87
    %v89 = vlaneseq
    %v90 = vshrl.u32 %v89, 7
    %v91 = vsub.s32 1, %v90
    %v92 = vrot.slane %v75, %v91
    %94 = vbcast.lane.b32.xlu0 %v92, 256
    %v95 = vpop.permute.xlu0 %94
    %v96 = vlaneseq
    %v97 = vshrl.u32 %v96, 7
    %v98 = vsub.s32 2, %v97
    %v99 = vrot.slane %v75, %v98
    %101 = vbcast.lane.b32.xlu0 %v99, 256
    %v102 = vpop.permute.xlu0 %101
    %v103 = vlaneseq
    %v104 = vshrl.u32 %v103, 7
    %v105 = vsub.s32 3, %v104
    %v106 = vrot.slane %v75, %v105
    %108 = vbcast.lane.b32.xlu0 %v106, 256
    %v109 = vpop.permute.xlu0 %108
    %v110 = vlaneseq
    %v111 = vshrl.u32 %v110, 7
    %v112 = vsub.s32 4, %v111
    %v113 = vrot.slane %v75, %v112
    %115 = vbcast.lane.b32.xlu0 %v113, 256
    %v116 = vpop.permute.xlu0 %115
    %v117 = vlaneseq
    %v118 = vshrl.u32 %v117, 7
    %v119 = vsub.s32 5, %v118
    %v120 = vrot.slane %v75, %v119
    %122 = vbcast.lane.b32.xlu0 %v120, 256
    %v123 = vpop.permute.xlu0 %122
    %v124 = vlaneseq
    %v125 = vshrl.u32 %v124, 7
    %v126 = vsub.s32 6, %v125
    %v127 = vrot.slane %v75, %v126
    %129 = vbcast.lane.b32.xlu0 %v127, 256
    %v130 = vpop.permute.xlu0 %129
    %v131 = vlaneseq
    %v132 = vshrl.u32 %v131, 7
    %v133 = vsub.s32 7, %v132
    %v134 = vrot.slane %v75, %v133
    %136 = vbcast.lane.b32.xlu0 %v134, 256
    %v137 = vpop.permute.xlu0 %136
    %v138 = vlaneseq
    %v139 = vshrl.u32 %v138, 7
    %v140 = vsub.s32 0, %v139
    %v141 = vrot.slane %v76, %v140
    %143 = vbcast.lane.b32.xlu0 %v141, 256
    %v144 = vpop.permute.xlu0 %143
    %v145 = vlaneseq
    %v146 = vshrl.u32 %v145, 7
    %v147 = vsub.s32 1, %v146
    %v148 = vrot.slane %v76, %v147
    %150 = vbcast.lane.b32.xlu0 %v148, 256
    %v151 = vpop.permute.xlu0 %150
    %v152 = vlaneseq
    %v153 = vshrl.u32 %v152, 7
    %v154 = vsub.s32 2, %v153
    %v155 = vrot.slane %v76, %v154
    %157 = vbcast.lane.b32.xlu0 %v155, 256
    %v158 = vpop.permute.xlu0 %157
    %v159 = vlaneseq
    %v160 = vshrl.u32 %v159, 7
    %v161 = vsub.s32 3, %v160
    %v162 = vrot.slane %v76, %v161
    %164 = vbcast.lane.b32.xlu0 %v162, 256
    %v165 = vpop.permute.xlu0 %164
    %v166 = vlaneseq
    %v167 = vshrl.u32 %v166, 7
    %v168 = vsub.s32 0, %v167
    %v169 = vrot.slane %v77, %v168
    %171 = vbcast.lane.b32.xlu0 %v169, 256
    %v172 = vpop.permute.xlu0 %171
    %v173 = vlaneseq
    %v174 = vshrl.u32 %v173, 7
    %v175 = vsub.s32 1, %v174
    %v176 = vrot.slane %v77, %v175
    %178 = vbcast.lane.b32.xlu0 %v176, 256
    %v179 = vpop.permute.xlu0 %178
    %v180 = vlaneseq
    %v181 = vshrl.u32 %v180, 7
    %v182 = vsub.s32 2, %v181
    %v183 = vrot.slane %v77, %v182
    %185 = vbcast.lane.b32.xlu0 %v183, 256
    %v186 = vpop.permute.xlu0 %185
    %v187 = vlaneseq
    %v188 = vshrl.u32 %v187, 7
    %v189 = vsub.s32 3, %v188
    %v190 = vrot.slane %v77, %v189
    %192 = vbcast.lane.b32.xlu0 %v190, 256
    %v193 = vpop.permute.xlu0 %192
    %v194 = vlaneseq
    %v195 = vshrl.u32 %v194, 7
    %v196 = vsub.s32 4, %v195
    %v197 = vrot.slane %v77, %v196
    %199 = vbcast.lane.b32.xlu0 %v197, 256
    %v200 = vpop.permute.xlu0 %199
    %v201 = vlaneseq
    %v202 = vshrl.u32 %v201, 7
    %v203 = vsub.s32 5, %v202
    %v204 = vrot.slane %v77, %v203
    %206 = vbcast.lane.b32.xlu0 %v204, 256
    %v207 = vpop.permute.xlu0 %206
    %v208 = vlaneseq
    %v209 = vshrl.u32 %v208, 7
    %v210 = vsub.s32 6, %v209
    %v211 = vrot.slane %v77, %v210
    %213 = vbcast.lane.b32.xlu0 %v211, 256
    %v214 = vpop.permute.xlu0 %213
    %v215 = vlaneseq
    %v216 = vshrl.u32 %v215, 7
    %v217 = vsub.s32 7, %v216
    %v218 = vrot.slane %v77, %v217
    %220 = vbcast.lane.b32.xlu0 %v218, 256
    %v221 = vpop.permute.xlu0 %220
    %v222 = vlaneseq
    %v223 = vshrl.u32 %v222, 7
    %v224 = vsub.s32 0, %v223
    %v225 = vrot.slane %v78, %v224
    %227 = vbcast.lane.b32.xlu0 %v225, 256
    %v228 = vpop.permute.xlu0 %227
    %v229 = vlaneseq
    %v230 = vshrl.u32 %v229, 7
    %v231 = vsub.s32 1, %v230
    %v232 = vrot.slane %v78, %v231
    %234 = vbcast.lane.b32.xlu0 %v232, 256
    %v235 = vpop.permute.xlu0 %234
    %v236 = vlaneseq
    %v237 = vshrl.u32 %v236, 7
    %v238 = vsub.s32 2, %v237
    %v239 = vrot.slane %v78, %v238
    %241 = vbcast.lane.b32.xlu0 %v239, 256
    %v242 = vpop.permute.xlu0 %241
    %v243 = vlaneseq
    %v244 = vshrl.u32 %v243, 7
    %v245 = vsub.s32 3, %v244
    %v246 = vrot.slane %v78, %v245
    %248 = vbcast.lane.b32.xlu0 %v246, 256
    %v249 = vpop.permute.xlu0 %248
    %v250 = vadd.s32 %v172, 64
    %v251 = vadd.s32 %v179, 64
    %v252 = vadd.s32 %v186, 64
    %v253 = vadd.s32 %v193, 64
    %v254 = vadd.s32 %v200, 64
    %v255 = vadd.s32 %v207, 64
    %v256 = vadd.s32 %v214, 64
    %v257 = vadd.s32 %v221, 64
    %v258 = vadd.s32 %v228, 64
    %v259 = vadd.s32 %v235, 64
    %v260 = vadd.s32 %v242, 64
    %v261 = vadd.s32 %v249, 64
    %v262 = vsel %vm81, %v88, %v250
    %v263 = vsel %vm81, %v95, %v251
    %v264 = vsel %vm81, %v102, %v252
    %v265 = vsel %vm81, %v109, %v253
    %v266 = vsel %vm81, %v116, %v254
    %v267 = vsel %vm81, %v123, %v255
    %v268 = vsel %vm81, %v130, %v256
    %v269 = vsel %vm81, %v137, %v257
    %v270 = vsel %vm81, %v144, %v258
    %v271 = vsel %vm81, %v151, %v259
    %v272 = vsel %vm81, %v158, %v260
    %v273 = vsel %vm81, %v165, %v261
    %vm274 = vcmp.eq.s32.totalorder %v80, %v262
    %vm275 = vcmp.eq.s32.totalorder %v80, %v263
    %vm276 = vcmp.eq.s32.totalorder %v80, %v264
    %vm277 = vcmp.eq.s32.totalorder %v80, %v265
    %vm278 = vcmp.eq.s32.totalorder %v80, %v266
    %vm279 = vcmp.eq.s32.totalorder %v80, %v267
    %vm280 = vcmp.eq.s32.totalorder %v80, %v268
    %vm281 = vcmp.eq.s32.totalorder %v80, %v269
    %vm282 = vcmp.eq.s32.totalorder %v80, %v270
    %vm283 = vcmp.eq.s32.totalorder %v80, %v271
    %vm284 = vcmp.eq.s32.totalorder %v80, %v272
    %vm285 = vcmp.eq.s32.totalorder %v80, %v273
    %v286 = vsel %vm274, 1.0, 0.0
    %v287 = vsel %vm275, 1.0, 0.0
    %v288 = vsel %vm276, 1.0, 0.0
    %v289 = vsel %vm277, 1.0, 0.0
    %v290 = vsel %vm278, 1.0, 0.0
    %v291 = vsel %vm279, 1.0, 0.0
    %v292 = vsel %vm280, 1.0, 0.0
    %v293 = vsel %vm281, 1.0, 0.0
    %v294 = vsel %vm282, 1.0, 0.0
    %v295 = vsel %vm283, 1.0, 0.0
    %v296 = vsel %vm284, 1.0, 0.0
    %v297 = vsel %vm285, 1.0, 0.0
    %v298 = vpack.c.bf16 %v287, %v286
    %v299 = vpack.c.bf16 %v289, %v288
    %v300 = vpack.c.bf16 %v291, %v290
    %v301 = vpack.c.bf16 %v293, %v292
    %v302 = vpack.c.bf16 %v295, %v294
    %v303 = vpack.c.bf16 %v297, %v296
    %v304 = vld [vmem:[#allocation3] sm:$0xff]
    %v305 = vld [vmem:[#allocation3 + $0x8] sm:$0xff]
    %v306 = vld [vmem:[#allocation3 + $0x10] sm:$0xff]
    %v307 = vld [vmem:[#allocation3 + $0x18] sm:$0xff]
    %v308 = vld [vmem:[#allocation3 + $0x20] sm:$0xff]
    %v309 = vld [vmem:[#allocation3 + $0x28] sm:$0xff]
    %v310 = vld [vmem:[#allocation3 + $0x30] sm:$0xff]
    %v311 = vld [vmem:[#allocation3 + $0x38] sm:$0xff]
    %v312 = vld [vmem:[#allocation3 + $0x40] sm:$0xff]
    %v313 = vld [vmem:[#allocation3 + $0x48] sm:$0xff]
    %v314 = vld [vmem:[#allocation3 + $0x50] sm:$0xff]
    %v315 = vld [vmem:[#allocation3 + $0x58] sm:$0xff]
    %v316 = vld [vmem:[#allocation3 + $0x60] sm:$0xff]
    %v317 = vld [vmem:[#allocation3 + $0x68] sm:$0xff]
    %v318 = vld [vmem:[#allocation3 + $0x70] sm:$0xff]
    %v319 = vld [vmem:[#allocation3 + $0x78] sm:$0xff]
    %v336 = vunpack.c.l.b16 %v304
    %v337 = vunpack.c.h.b16 %v304
    %v338 = vunpack.c.l.b16 %v305
    %v339 = vunpack.c.h.b16 %v305
    %v340 = vunpack.c.l.b16 %v306
    %v341 = vunpack.c.h.b16 %v306
    %v342 = vunpack.c.l.b16 %v307
    %v343 = vunpack.c.h.b16 %v307
    %v344 = vunpack.c.l.b16 %v308
    %v345 = vunpack.c.h.b16 %v308
    %v346 = vunpack.c.l.b16 %v309
    %v347 = vunpack.c.h.b16 %v309
    %v348 = vunpack.c.l.b16 %v310
    %v349 = vunpack.c.h.b16 %v310
    %v350 = vunpack.c.l.b16 %v311
    %v351 = vunpack.c.h.b16 %v311
    %v352 = vunpack.c.l.b16 %v312
    %v353 = vunpack.c.h.b16 %v312
    %v354 = vunpack.c.l.b16 %v313
    %v355 = vunpack.c.h.b16 %v313
    %v356 = vunpack.c.l.b16 %v314
    %v357 = vunpack.c.h.b16 %v314
    %v358 = vunpack.c.l.b16 %v315
    %v359 = vunpack.c.h.b16 %v315
    %v360 = vunpack.c.l.b16 %v316
    %v361 = vunpack.c.h.b16 %v316
    %v362 = vunpack.c.l.b16 %v317
    %v363 = vunpack.c.h.b16 %v317
    %v364 = vunpack.c.l.b16 %v318
    %v365 = vunpack.c.h.b16 %v318
    %v366 = vunpack.c.l.b16 %v319
    %v367 = vunpack.c.h.b16 %v319
    %v368 = vpack.c.b16 %v338, %v336
    %v369 = vpack.c.b16 %v339, %v337
    %v370 = vpack.c.b16 %v342, %v340
    %v371 = vpack.c.b16 %v343, %v341
    %v372 = vpack.c.b16 %v346, %v344
    %v373 = vpack.c.b16 %v347, %v345
    %v374 = vpack.c.b16 %v350, %v348
    %v375 = vpack.c.b16 %v351, %v349
    %v376 = vpack.c.b16 %v354, %v352
    %v377 = vpack.c.b16 %v355, %v353
    %v378 = vpack.c.b16 %v358, %v356
    %v379 = vpack.c.b16 %v359, %v357
    %v380 = vpack.c.b16 %v362, %v360
    %v381 = vpack.c.b16 %v363, %v361
    %v382 = vpack.c.b16 %v366, %v364
    %v383 = vpack.c.b16 %v367, %v365
    %400 = vmatprep.subr.bf16.mxu0 %v369
    %401 = vmatpush1.bf16.msra.mxu0 %v368
    %402 = vmatprep.subr.bf16.mxu0 %v371
    %403 = vmatpush1.bf16.msra.mxu0 %v370
    %404 = vmatprep.subr.bf16.mxu0 %v373
    %405 = vmatpush1.bf16.msra.mxu0 %v372
    %406 = vmatprep.subr.bf16.mxu0 %v375
    %407 = vmatpush1.bf16.msra.mxu0 %v374
    %408 = vmatprep.subr.bf16.mxu0 %v377
    %409 = vmatpush1.bf16.msra.mxu0 %v376
    %410 = vmatprep.subr.bf16.mxu0 %v379
    %411 = vmatpush1.bf16.msra.mxu0 %v378
    %412 = vmatprep.subr.bf16.mxu0 %v381
    %413 = vmatpush1.bf16.msra.mxu0 %v380
    %414 = vmatprep.subr.bf16.mxu0 %v383
    %415 = vmatpush1.bf16.msra.mxu0 %v382
    %416 = vmatprep.subr.bf16.mxu0 0
    %417 = vmatpush1.bf16.msra.mxu0 0
    %418 = vmatprep.subr.bf16.mxu0 0
    %419 = vmatpush1.bf16.msra.mxu0 0
    %420 = vmatprep.subr.bf16.mxu0 0
    %421 = vmatpush1.bf16.msra.mxu0 0
    %422 = vmatprep.subr.bf16.mxu0 0
    %423 = vmatpush1.bf16.msra.mxu0 0
    %424 = vmatprep.subr.bf16.mxu0 0
    %425 = vmatpush1.bf16.msra.mxu0 0
    %426 = vmatprep.subr.bf16.mxu0 0
    %427 = vmatpush1.bf16.msra.mxu0 0
    %428 = vmatprep.subr.bf16.mxu0 0
    %429 = vmatpush1.bf16.msra.mxu0 0
    %430 = vmatprep.subr.bf16.mxu0 0
    %431 = vmatpush1.bf16.msra.mxu0 0
    %432 = vmatprep.mubr.bf16.mxu0 0
    %433 = vmatmul.mubr.bf16.gmra.mrb[0].mxu0 %v298
    %v434 = vpop.f32.mrb[0].mxu0
    %v435 = vadd.f32 0.0, %v434
    %v436 = vpop.f32.mrb[0].mxu0
    %v437 = vadd.f32 0.0, %v436
    %v438 = vpop.f32.mrb[0].mxu0
    %v439 = vadd.f32 0.0, %v438
    %v440 = vpop.f32.mrb[0].mxu0
    %v441 = vadd.f32 0.0, %v440
    %442 = vmatprep.mubr.bf16.mxu0 0
    %443 = vmatmul.mubr.bf16.gmra.mrb[0].mxu0 %v299
    %v444 = vpop.f32.mrb[0].mxu0
    %v445 = vadd.f32 0.0, %v444
    %v446 = vpop.f32.mrb[0].mxu0
    %v447 = vadd.f32 0.0, %v446
    %v448 = vpop.f32.mrb[0].mxu0
    %v449 = vadd.f32 0.0, %v448
    %v450 = vpop.f32.mrb[0].mxu0
    %v451 = vadd.f32 0.0, %v450
    %452 = vmatprep.mubr.bf16.mxu0 0
    %453 = vmatmul.mubr.bf16.gmra.mrb[0].mxu0 %v300
    %v454 = vpop.f32.mrb[0].mxu0
    %v455 = vadd.f32 0.0, %v454
    %v456 = vpop.f32.mrb[0].mxu0
    %v457 = vadd.f32 0.0, %v456
    %v458 = vpop.f32.mrb[0].mxu0
    %v459 = vadd.f32 0.0, %v458
    %v460 = vpop.f32.mrb[0].mxu0
    %v461 = vadd.f32 0.0, %v460
    %462 = vmatprep.mubr.bf16.mxu0 0
    %463 = vmatmul.mubr.bf16.gmra.mrb[0].mxu0 %v301
    %v464 = vpop.f32.mrb[0].mxu0
    %v465 = vadd.f32 0.0, %v464
    %v466 = vpop.f32.mrb[0].mxu0
    %v467 = vadd.f32 0.0, %v466
    %v468 = vpop.f32.mrb[0].mxu0
    %v469 = vadd.f32 0.0, %v468
    %v470 = vpop.f32.mrb[0].mxu0
    %v471 = vadd.f32 0.0, %v470
    %472 = vmatprep.mubr.bf16.mxu0 0
    %473 = vmatmul.mubr.bf16.gmra.mrb[0].mxu0 %v302
    %v474 = vpop.f32.mrb[0].mxu0
    %v475 = vadd.f32 0.0, %v474
    %v476 = vpop.f32.mrb[0].mxu0
    %v477 = vadd.f32 0.0, %v476
    %v478 = vpop.f32.mrb[0].mxu0
    %v479 = vadd.f32 0.0, %v478
    %v480 = vpop.f32.mrb[0].mxu0
    %v481 = vadd.f32 0.0, %v480
    %482 = vmatprep.mubr.bf16.mxu0 0
    %483 = vmatmul.mubr.bf16.gmra.mrb[0].mxu0 %v303
    %v484 = vpop.f32.mrb[0].mxu0
    %v485 = vadd.f32 0.0, %v484
    %v486 = vpop.f32.mrb[0].mxu0
    %v487 = vadd.f32 0.0, %v486
    %v488 = vpop.f32.mrb[0].mxu0
    %v489 = vadd.f32 0.0, %v488
    %v490 = vpop.f32.mrb[0].mxu0
    %v491 = vadd.f32 0.0, %v490
    %492 = vdwg.mxu0
    %493 = vst [vmem:[#allocation2] sm:$0xff] %v435
    %494 = vst [vmem:[#allocation2 + $0x8] sm:$0xff] %v437
    %495 = vst [vmem:[#allocation2 + $0x10] sm:$0xff] %v439
    %496 = vst [vmem:[#allocation2 + $0x18] sm:$0xff] %v441
    %497 = vst [vmem:[#allocation2 + $0x20] sm:$0xff] %v445
    %498 = vst [vmem:[#allocation2 + $0x28] sm:$0xff] %v447
    %499 = vst [vmem:[#allocation2 + $0x30] sm:$0xff] %v449
    %500 = vst [vmem:[#allocation2 + $0x38] sm:$0xff] %v451
    %501 = vst [vmem:[#allocation2 + $0x40] sm:$0xff] %v455
    %502 = vst [vmem:[#allocation2 + $0x48] sm:$0xff] %v457
    %503 = vst [vmem:[#allocation2 + $0x50] sm:$0xff] %v459
    %504 = vst [vmem:[#allocation2 + $0x58] sm:$0xff] %v461
    %505 = vst [vmem:[#allocation2 + $0x60] sm:$0xff] %v465
    %506 = vst [vmem:[#allocation2 + $0x68] sm:$0xff] %v467
    %507 = vst [vmem:[#allocation2 + $0x70] sm:$0xff] %v469
    %508 = vst [vmem:[#allocation2 + $0x78] sm:$0xff] %v471
    %509 = vst [vmem:[#allocation2 + $0x80] sm:$0xff] %v475
    %510 = vst [vmem:[#allocation2 + $0x88] sm:$0xff] %v477
    %511 = vst [vmem:[#allocation2 + $0x90] sm:$0xff] %v479
    %512 = vst [vmem:[#allocation2 + $0x98] sm:$0xff] %v481
    %513 = vst [vmem:[#allocation2 + $0xa0] sm:$0xff] %v485
    %514 = vst [vmem:[#allocation2 + $0xa8] sm:$0xff] %v487
    %515 = vst [vmem:[#allocation2 + $0xb0] sm:$0xff] %v489
    %516 = vst [vmem:[#allocation2 + $0xb8] sm:$0xff] %v491
    %v517 = vld [vmem:[%s2] sm:$0xff]
    %v518 = vld [vmem:[#allocation6] sm:$0xff]
    %v519 = vld [vmem:[#allocation6 + $0x8] sm:$0xff]
    %v520 = vld [vmem:[#allocation6 + $0x10] sm:$0xff]
    %v521 = vld [vmem:[#allocation6 + $0x18] sm:$0xff]
    %v522 = vld [vmem:[#allocation6 + $0x20] sm:$0xff]
    %v523 = vld [vmem:[#allocation6 + $0x28] sm:$0xff]
    %v524 = vld [vmem:[#allocation6 + $0x30] sm:$0xff]
    %v525 = vld [vmem:[#allocation6 + $0x38] sm:$0xff]
    %v526 = vld [vmem:[#allocation2] sm:$0xff]
    %v527 = vld [vmem:[#allocation2 + $0x8] sm:$0xff]
    %v536 = vunpack.c.l.b16 %v518
    %v537 = vunpack.c.h.b16 %v518
    %v538 = vunpack.c.l.b16 %v519
    %v539 = vunpack.c.h.b16 %v519
    %v540 = vunpack.c.l.b16 %v520
    %v541 = vunpack.c.h.b16 %v520
    %v542 = vunpack.c.l.b16 %v521
    %v543 = vunpack.c.h.b16 %v521
    %v544 = vunpack.c.l.b16 %v522
    %v545 = vunpack.c.h.b16 %v522
    %v546 = vunpack.c.l.b16 %v523
    %v547 = vunpack.c.h.b16 %v523
    %v548 = vunpack.c.l.b16 %v524
    %v549 = vunpack.c.h.b16 %v524
    %v550 = vunpack.c.l.b16 %v525
    %v551 = vunpack.c.h.b16 %v525
    %v552 = vpack.c.b16 %v538, %v536
    %v553 = vpack.c.b16 %v539, %v537
    %v554 = vpack.c.b16 %v542, %v540
    %v555 = vpack.c.b16 %v543, %v541
    %v556 = vpack.c.b16 %v546, %v544
    %v557 = vpack.c.b16 %v547, %v545
    %v558 = vpack.c.b16 %v550, %v548
    %v559 = vpack.c.b16 %v551, %v549
    %vm568 = vcmask 523264
    %v570 = vsel %vm568, 0, 0
    %572 = vmatprep.subr.bf16.mxu0 %v553
    %573 = vmatpush1.bf16.msra.mxu0 %v552
    %574 = vmatprep.subr.bf16.mxu0 %v555
    %575 = vmatpush1.bf16.msra.mxu0 %v554
    %576 = vmatprep.subr.bf16.mxu0 %v557
    %577 = vmatpush1.bf16.msra.mxu0 %v556
    %578 = vmatprep.subr.bf16.mxu0 %v559
    %579 = vmatpush1.bf16.msra.mxu0 %v558
    %580 = vmatprep.subr.bf16.mxu0 0
    %581 = vmatpush1.bf16.msra.mxu0 0
    %582 = vmatprep.subr.bf16.mxu0 0
    %583 = vmatpush1.bf16.msra.mxu0 0
    %584 = vmatprep.subr.bf16.mxu0 0
    %585 = vmatpush1.bf16.msra.mxu0 0
    %586 = vmatprep.subr.bf16.mxu0 0
    %587 = vmatpush1.bf16.msra.mxu0 0
    %588 = vmatprep.subr.bf16.mxu0 0
    %589 = vmatpush1.bf16.msra.mxu0 0
    %590 = vmatprep.subr.bf16.mxu0 0
    %591 = vmatpush1.bf16.msra.mxu0 0
    %592 = vmatprep.subr.bf16.mxu0 0
    %593 = vmatpush1.bf16.msra.mxu0 0
    %594 = vmatprep.subr.bf16.mxu0 0
    %595 = vmatpush1.bf16.msra.mxu0 0
    %596 = vmatprep.subr.bf16.mxu0 0
    %597 = vmatpush1.bf16.msra.mxu0 0
    %598 = vmatprep.subr.bf16.mxu0 0
    %599 = vmatpush1.bf16.msra.mxu0 0
    %600 = vmatprep.subr.bf16.mxu0 0
    %601 = vmatpush1.bf16.msra.mxu0 0
    %602 = vmatprep.subr.bf16.mxu0 0
    %603 = vmatpush1.bf16.msra.mxu0 0
    %604 = vmatprep.mubr.bf16.mxu0 0
    %605 = vmatmul.mubr.bf16.gmra.mrb[0].mxu0 %v570
    %v606 = vpop.f32.mrb[0].mxu0
    %v607 = vadd.f32 %v526, %v606
    %v608 = vpop.f32.mrb[0].mxu0
    %v609 = vadd.f32 %v527, %v608
    %v610 = vpop.f32.mrb[0].mxu0
    %v611 = vpop.f32.mrb[0].mxu0
    %612 = vdwg.mxu0
    %v613 = vxor.u32 %v607, 2147483648
    %v614 = vxor.u32 %v609, 2147483648
    %v615 = vmul.f32 %v613, 1.442695
    %v616 = vpow.pop %v615
    %v617 = vmul.f32 %v614, 1.442695
    %v618 = vpow.pop %v617
    %v619 = vadd.f32 %v616, 1.0
    %v620 = vadd.f32 %v618, 1.0
    %v621 = vrcp.pop %v619
    %v622 = vmul.f32 1.0, %v621
    %v623 = vrcp.pop %v620
    %v624 = vmul.f32 1.0, %v623
    %v625 = vtanh.pop %v609
    %v626 = vmul.f32 %v622, 0.0
    %628 = vrot.lane.b32.xlu0 %v625, 64
    %v629 = vpop.permute.xlu0 %628
    %v631 = vmul.f32 %v622, %v629
    %633 = vrot.lane.b32.xlu0 %v631, 64
    %v634 = vpop.permute.xlu0 %633
    %v636 = vadd.f32 %v626, %v634
    %v637 = vtanh.pop %v636
    %639 = vrot.lane.b32.xlu0 %v637, 64
    %v640 = vpop.permute.xlu0 %639
    %v642 = vmul.f32 %v624, %v640
    %vm643 = vcmp.eq.s32.totalorder %v517, 1
    %v644 = vsel %vm643, %v642, 0.0
    %v645 = vpack.c.bf16 %v642, %v642
    %s646 = scalar_lea.vmem [#allocation2], 16
    %v647 = vld [vmem:[%s646] sm:$0xff]
    %v648 = vld [vmem:[%s646 + $0x8] sm:$0xff]
    %v650 = vsel %vm568, %v645, 0
    %652 = vmatprep.subr.bf16.mxu0 %v553
    %653 = vmatpush1.bf16.msra.mxu0 %v552
    %654 = vmatprep.subr.bf16.mxu0 %v555
    %655 = vmatpush1.bf16.msra.mxu0 %v554
    %656 = vmatprep.subr.bf16.mxu0 %v557
    %657 = vmatpush1.bf16.msra.mxu0 %v556
    %658 = vmatprep.subr.bf16.mxu0 %v559
    %659 = vmatpush1.bf16.msra.mxu0 %v558
    %660 = vmatprep.subr.bf16.mxu0 0
    %661 = vmatpush1.bf16.msra.mxu0 0
    %662 = vmatprep.subr.bf16.mxu0 0
    %663 = vmatpush1.bf16.msra.mxu0 0
    %664 = vmatprep.subr.bf16.mxu0 0
    %665 = vmatpush1.bf16.msra.mxu0 0
    %666 = vmatprep.subr.bf16.mxu0 0
    %667 = vmatpush1.bf16.msra.mxu0 0
    %668 = vmatprep.subr.bf16.mxu0 0
    %669 = vmatpush1.bf16.msra.mxu0 0
    %670 = vmatprep.subr.bf16.mxu0 0
    %671 = vmatpush1.bf16.msra.mxu0 0
    %672 = vmatprep.subr.bf16.mxu0 0
    %673 = vmatpush1.bf16.msra.mxu0 0
    %674 = vmatprep.subr.bf16.mxu0 0
    %675 = vmatpush1.bf16.msra.mxu0 0
    %676 = vmatprep.subr.bf16.mxu0 0
    %677 = vmatpush1.bf16.msra.mxu0 0
    %678 = vmatprep.subr.bf16.mxu0 0
    %679 = vmatpush1.bf16.msra.mxu0 0
    %680 = vmatprep.subr.bf16.mxu0 0
    %681 = vmatpush1.bf16.msra.mxu0 0
    %682 = vmatprep.subr.bf16.mxu0 0
    %683 = vmatpush1.bf16.msra.mxu0 0
    %684 = vmatprep.mubr.bf16.mxu0 0
    %685 = vmatmul.mubr.bf16.gmra.mrb[0].mxu0 %v650
    %v686 = vpop.f32.mrb[0].mxu0
    %v687 = vadd.f32 %v647, %v686
    %v688 = vpop.f32.mrb[0].mxu0
    %v689 = vadd.f32 %v648, %v688
    %v690 = vpop.f32.mrb[0].mxu0
    %v691 = vpop.f32.mrb[0].mxu0
    %692 = vdwg.mxu0
    %v693 = vxor.u32 %v687, 2147483648
    %v694 = vxor.u32 %v689, 2147483648
    %v695 = vmul.f32 %v693, 1.442695
    %v696 = vpow.pop %v695
    %v697 = vmul.f32 %v694, 1.442695
    %v698 = vpow.pop %v697
    %v699 = vadd.f32 %v696, 1.0
    %v700 = vadd.f32 %v698, 1.0
    %v701 = vrcp.pop %v699
    %v702 = vmul.f32 1.0, %v701
    %v703 = vrcp.pop %v700
    %v704 = vmul.f32 1.0, %v703
    %v705 = vtanh.pop %v689
    %v706 = vmul.f32 %v702, %v636
    %708 = vrot.lane.b32.xlu0 %v705, 64
    %v709 = vpop.permute.xlu0 %708
    %v711 = vmul.f32 %v702, %v709
    %713 = vrot.lane.b32.xlu0 %v711, 64
    %v714 = vpop.permute.xlu0 %713
    %v716 = vadd.f32 %v706, %v714
    %v717 = vtanh.pop %v716
    %719 = vrot.lane.b32.xlu0 %v717, 64
    %v720 = vpop.permute.xlu0 %719
    %v722 = vmul.f32 %v704, %v720
    %vm723 = vcmp.eq.s32.totalorder %v517, 2
    %v724 = vsel %vm723, %v722, %v644
    %v725 = vpack.c.bf16 %v722, %v722
    %s726 = scalar_lea.vmem [#allocation2], 32
    %v727 = vld [vmem:[%s726] sm:$0xff]
    %v728 = vld [vmem:[%s726 + $0x8] sm:$0xff]
    %v730 = vsel %vm568, %v725, 0
    %732 = vmatprep.subr.bf16.mxu0 %v553
    %733 = vmatpush1.bf16.msra.mxu0 %v552
    %734 = vmatprep.subr.bf16.mxu0 %v555
    %735 = vmatpush1.bf16.msra.mxu0 %v554
    %736 = vmatprep.subr.bf16.mxu0 %v557
    %737 = vmatpush1.bf16.msra.mxu0 %v556
    %738 = vmatprep.subr.bf16.mxu0 %v559
    %739 = vmatpush1.bf16.msra.mxu0 %v558
    %740 = vmatprep.subr.bf16.mxu0 0
    %741 = vmatpush1.bf16.msra.mxu0 0
    %742 = vmatprep.subr.bf16.mxu0 0
    %743 = vmatpush1.bf16.msra.mxu0 0
    %744 = vmatprep.subr.bf16.mxu0 0
    %745 = vmatpush1.bf16.msra.mxu0 0
    %746 = vmatprep.subr.bf16.mxu0 0
    %747 = vmatpush1.bf16.msra.mxu0 0
    %748 = vmatprep.subr.bf16.mxu0 0
    %749 = vmatpush1.bf16.msra.mxu0 0
    %750 = vmatprep.subr.bf16.mxu0 0
    %751 = vmatpush1.bf16.msra.mxu0 0
    %752 = vmatprep.subr.bf16.mxu0 0
    %753 = vmatpush1.bf16.msra.mxu0 0
    %754 = vmatprep.subr.bf16.mxu0 0
    %755 = vmatpush1.bf16.msra.mxu0 0
    %756 = vmatprep.subr.bf16.mxu0 0
    %757 = vmatpush1.bf16.msra.mxu0 0
    %758 = vmatprep.subr.bf16.mxu0 0
    %759 = vmatpush1.bf16.msra.mxu0 0
    %760 = vmatprep.subr.bf16.mxu0 0
    %761 = vmatpush1.bf16.msra.mxu0 0
    %762 = vmatprep.subr.bf16.mxu0 0
    %763 = vmatpush1.bf16.msra.mxu0 0
    %764 = vmatprep.mubr.bf16.mxu0 0
    %765 = vmatmul.mubr.bf16.gmra.mrb[0].mxu0 %v730
    %v766 = vpop.f32.mrb[0].mxu0
    %v767 = vadd.f32 %v727, %v766
    %v768 = vpop.f32.mrb[0].mxu0
    %v769 = vadd.f32 %v728, %v768
    %v770 = vpop.f32.mrb[0].mxu0
    %v771 = vpop.f32.mrb[0].mxu0
    %772 = vdwg.mxu0
    %v773 = vxor.u32 %v767, 2147483648
    %v774 = vxor.u32 %v769, 2147483648
    %v775 = vmul.f32 %v773, 1.442695
    %v776 = vpow.pop %v775
    %v777 = vmul.f32 %v774, 1.442695
    %v778 = vpow.pop %v777
    %v779 = vadd.f32 %v776, 1.0
    %v780 = vadd.f32 %v778, 1.0
    %v781 = vrcp.pop %v779
    %v782 = vmul.f32 1.0, %v781
    %v783 = vrcp.pop %v780
    %v784 = vmul.f32 1.0, %v783
    %v785 = vtanh.pop %v769
    %v786 = vmul.f32 %v782, %v716
    %788 = vrot.lane.b32.xlu0 %v785, 64
    %v789 = vpop.permute.xlu0 %788
    %v791 = vmul.f32 %v782, %v789
    %793 = vrot.lane.b32.xlu0 %v791, 64
    %v794 = vpop.permute.xlu0 %793
    %v796 = vadd.f32 %v786, %v794
    %v797 = vtanh.pop %v796
    %799 = vrot.lane.b32.xlu0 %v797, 64
    %v800 = vpop.permute.xlu0 %799
    %v802 = vmul.f32 %v784, %v800
    %vm803 = vcmp.eq.s32.totalorder %v517, 3
    %v804 = vsel %vm803, %v802, %v724
    %v805 = vpack.c.bf16 %v802, %v802
    %s806 = scalar_lea.vmem [#allocation2], 48
    %v807 = vld [vmem:[%s806] sm:$0xff]
    %v808 = vld [vmem:[%s806 + $0x8] sm:$0xff]
    %v810 = vsel %vm568, %v805, 0
    %812 = vmatprep.subr.bf16.mxu0 %v553
    %813 = vmatpush1.bf16.msra.mxu0 %v552
    %814 = vmatprep.subr.bf16.mxu0 %v555
    %815 = vmatpush1.bf16.msra.mxu0 %v554
    %816 = vmatprep.subr.bf16.mxu0 %v557
    %817 = vmatpush1.bf16.msra.mxu0 %v556
    %818 = vmatprep.subr.bf16.mxu0 %v559
    %819 = vmatpush1.bf16.msra.mxu0 %v558
    %820 = vmatprep.subr.bf16.mxu0 0
    %821 = vmatpush1.bf16.msra.mxu0 0
    %822 = vmatprep.subr.bf16.mxu0 0
    %823 = vmatpush1.bf16.msra.mxu0 0
    %824 = vmatprep.subr.bf16.mxu0 0
    %825 = vmatpush1.bf16.msra.mxu0 0
    %826 = vmatprep.subr.bf16.mxu0 0
    %827 = vmatpush1.bf16.msra.mxu0 0
    %828 = vmatprep.subr.bf16.mxu0 0
    %829 = vmatpush1.bf16.msra.mxu0 0
    %830 = vmatprep.subr.bf16.mxu0 0
    %831 = vmatpush1.bf16.msra.mxu0 0
    %832 = vmatprep.subr.bf16.mxu0 0
    %833 = vmatpush1.bf16.msra.mxu0 0
    %834 = vmatprep.subr.bf16.mxu0 0
    %835 = vmatpush1.bf16.msra.mxu0 0
    %836 = vmatprep.subr.bf16.mxu0 0
    %837 = vmatpush1.bf16.msra.mxu0 0
    %838 = vmatprep.subr.bf16.mxu0 0
    %839 = vmatpush1.bf16.msra.mxu0 0
    %840 = vmatprep.subr.bf16.mxu0 0
    %841 = vmatpush1.bf16.msra.mxu0 0
    %842 = vmatprep.subr.bf16.mxu0 0
    %843 = vmatpush1.bf16.msra.mxu0 0
    %844 = vmatprep.mubr.bf16.mxu0 0
    %845 = vmatmul.mubr.bf16.gmra.mrb[0].mxu0 %v810
    %v846 = vpop.f32.mrb[0].mxu0
    %v847 = vadd.f32 %v807, %v846
    %v848 = vpop.f32.mrb[0].mxu0
    %v849 = vadd.f32 %v808, %v848
    %v850 = vpop.f32.mrb[0].mxu0
    %v851 = vpop.f32.mrb[0].mxu0
    %852 = vdwg.mxu0
    %v853 = vxor.u32 %v847, 2147483648
    %v854 = vxor.u32 %v849, 2147483648
    %v855 = vmul.f32 %v853, 1.442695
    %v856 = vpow.pop %v855
    %v857 = vmul.f32 %v854, 1.442695
    %v858 = vpow.pop %v857
    %v859 = vadd.f32 %v856, 1.0
    %v860 = vadd.f32 %v858, 1.0
    %v861 = vrcp.pop %v859
    %v862 = vmul.f32 1.0, %v861
    %v863 = vrcp.pop %v860
    %v864 = vmul.f32 1.0, %v863
    %v865 = vtanh.pop %v849
    %v866 = vmul.f32 %v862, %v796
    %868 = vrot.lane.b32.xlu0 %v865, 64
    %v869 = vpop.permute.xlu0 %868
    %v871 = vmul.f32 %v862, %v869
    %873 = vrot.lane.b32.xlu0 %v871, 64
    %v874 = vpop.permute.xlu0 %873
    %v876 = vadd.f32 %v866, %v874
    %v877 = vtanh.pop %v876
    %879 = vrot.lane.b32.xlu0 %v877, 64
    %v880 = vpop.permute.xlu0 %879
    %v882 = vmul.f32 %v864, %v880
    %vm883 = vcmp.eq.s32.totalorder %v517, 4
    %v884 = vsel %vm883, %v882, %v804
    %v885 = vpack.c.bf16 %v882, %v882
    %s886 = scalar_lea.vmem [#allocation2], 64
    %v887 = vld [vmem:[%s886] sm:$0xff]
    %v888 = vld [vmem:[%s886 + $0x8] sm:$0xff]
    %v890 = vsel %vm568, %v885, 0
    %892 = vmatprep.subr.bf16.mxu0 %v553
    %893 = vmatpush1.bf16.msra.mxu0 %v552
    %894 = vmatprep.subr.bf16.mxu0 %v555
    %895 = vmatpush1.bf16.msra.mxu0 %v554
    %896 = vmatprep.subr.bf16.mxu0 %v557
    %897 = vmatpush1.bf16.msra.mxu0 %v556
    %898 = vmatprep.subr.bf16.mxu0 %v559
    %899 = vmatpush1.bf16.msra.mxu0 %v558
    %900 = vmatprep.subr.bf16.mxu0 0
    %901 = vmatpush1.bf16.msra.mxu0 0
    %902 = vmatprep.subr.bf16.mxu0 0
    %903 = vmatpush1.bf16.msra.mxu0 0
    %904 = vmatprep.subr.bf16.mxu0 0
    %905 = vmatpush1.bf16.msra.mxu0 0
    %906 = vmatprep.subr.bf16.mxu0 0
    %907 = vmatpush1.bf16.msra.mxu0 0
    %908 = vmatprep.subr.bf16.mxu0 0
    %909 = vmatpush1.bf16.msra.mxu0 0
    %910 = vmatprep.subr.bf16.mxu0 0
    %911 = vmatpush1.bf16.msra.mxu0 0
    %912 = vmatprep.subr.bf16.mxu0 0
    %913 = vmatpush1.bf16.msra.mxu0 0
    %914 = vmatprep.subr.bf16.mxu0 0
    %915 = vmatpush1.bf16.msra.mxu0 0
    %916 = vmatprep.subr.bf16.mxu0 0
    %917 = vmatpush1.bf16.msra.mxu0 0
    %918 = vmatprep.subr.bf16.mxu0 0
    %919 = vmatpush1.bf16.msra.mxu0 0
    %920 = vmatprep.subr.bf16.mxu0 0
    %921 = vmatpush1.bf16.msra.mxu0 0
    %922 = vmatprep.subr.bf16.mxu0 0
    %923 = vmatpush1.bf16.msra.mxu0 0
    %924 = vmatprep.mubr.bf16.mxu0 0
    %925 = vmatmul.mubr.bf16.gmra.mrb[0].mxu0 %v890
    %v926 = vpop.f32.mrb[0].mxu0
    %v927 = vadd.f32 %v887, %v926
    %v928 = vpop.f32.mrb[0].mxu0
    %v929 = vadd.f32 %v888, %v928
    %v930 = vpop.f32.mrb[0].mxu0
    %v931 = vpop.f32.mrb[0].mxu0
    %932 = vdwg.mxu0
    %v933 = vxor.u32 %v927, 2147483648
    %v934 = vxor.u32 %v929, 2147483648
    %v935 = vmul.f32 %v933, 1.442695
    %v936 = vpow.pop %v935
    %v937 = vmul.f32 %v934, 1.442695
    %v938 = vpow.pop %v937
    %v939 = vadd.f32 %v936, 1.0
    %v940 = vadd.f32 %v938, 1.0
    %v941 = vrcp.pop %v939
    %v942 = vmul.f32 1.0, %v941
    %v943 = vrcp.pop %v940
    %v944 = vmul.f32 1.0, %v943
    %v945 = vtanh.pop %v929
    %v946 = vmul.f32 %v942, %v876
    %948 = vrot.lane.b32.xlu0 %v945, 64
    %v949 = vpop.permute.xlu0 %948
    %v951 = vmul.f32 %v942, %v949
    %953 = vrot.lane.b32.xlu0 %v951, 64
    %v954 = vpop.permute.xlu0 %953
    %v956 = vadd.f32 %v946, %v954
    %v957 = vtanh.pop %v956
    %959 = vrot.lane.b32.xlu0 %v957, 64
    %v960 = vpop.permute.xlu0 %959
    %v962 = vmul.f32 %v944, %v960
    %vm963 = vcmp.eq.s32.totalorder %v517, 5
    %v964 = vsel %vm963, %v962, %v884
    %v965 = vpack.c.bf16 %v962, %v962
    %s966 = scalar_lea.vmem [#allocation2], 80
    %v967 = vld [vmem:[%s966] sm:$0xff]
    %v968 = vld [vmem:[%s966 + $0x8] sm:$0xff]
    %v970 = vsel %vm568, %v965, 0
    %972 = vmatprep.subr.bf16.mxu0 %v553
    %973 = vmatpush1.bf16.msra.mxu0 %v552
    %974 = vmatprep.subr.bf16.mxu0 %v555
    %975 = vmatpush1.bf16.msra.mxu0 %v554
    %976 = vmatprep.subr.bf16.mxu0 %v557
    %977 = vmatpush1.bf16.msra.mxu0 %v556
    %978 = vmatprep.subr.bf16.mxu0 %v559
    %979 = vmatpush1.bf16.msra.mxu0 %v558
    %980 = vmatprep.subr.bf16.mxu0 0
    %981 = vmatpush1.bf16.msra.mxu0 0
    %982 = vmatprep.subr.bf16.mxu0 0
    %983 = vmatpush1.bf16.msra.mxu0 0
    %984 = vmatprep.subr.bf16.mxu0 0
    %985 = vmatpush1.bf16.msra.mxu0 0
    %986 = vmatprep.subr.bf16.mxu0 0
    %987 = vmatpush1.bf16.msra.mxu0 0
    %988 = vmatprep.subr.bf16.mxu0 0
    %989 = vmatpush1.bf16.msra.mxu0 0
    %990 = vmatprep.subr.bf16.mxu0 0
    %991 = vmatpush1.bf16.msra.mxu0 0
    %992 = vmatprep.subr.bf16.mxu0 0
    %993 = vmatpush1.bf16.msra.mxu0 0
    %994 = vmatprep.subr.bf16.mxu0 0
    %995 = vmatpush1.bf16.msra.mxu0 0
    %996 = vmatprep.subr.bf16.mxu0 0
    %997 = vmatpush1.bf16.msra.mxu0 0
    %998 = vmatprep.subr.bf16.mxu0 0
    %999 = vmatpush1.bf16.msra.mxu0 0
    %1000 = vmatprep.subr.bf16.mxu0 0
    %1001 = vmatpush1.bf16.msra.mxu0 0
    %1002 = vmatprep.subr.bf16.mxu0 0
    %1003 = vmatpush1.bf16.msra.mxu0 0
    %1004 = vmatprep.mubr.bf16.mxu0 0
    %1005 = vmatmul.mubr.bf16.gmra.mrb[0].mxu0 %v970
    %v1006 = vpop.f32.mrb[0].mxu0
    %v1007 = vadd.f32 %v967, %v1006
    %v1008 = vpop.f32.mrb[0].mxu0
    %v1009 = vadd.f32 %v968, %v1008
    %v1010 = vpop.f32.mrb[0].mxu0
    %v1011 = vpop.f32.mrb[0].mxu0
    %1012 = vdwg.mxu0
    %v1013 = vxor.u32 %v1007, 2147483648
    %v1014 = vxor.u32 %v1009, 2147483648
    %v1015 = vmul.f32 %v1013, 1.442695
    %v1016 = vpow.pop %v1015
    %v1017 = vmul.f32 %v1014, 1.442695
    %v1018 = vpow.pop %v1017
    %v1019 = vadd.f32 %v1016, 1.0
    %v1020 = vadd.f32 %v1018, 1.0
    %v1021 = vrcp.pop %v1019
    %v1022 = vmul.f32 1.0, %v1021
    %v1023 = vrcp.pop %v1020
    %v1024 = vmul.f32 1.0, %v1023
    %v1025 = vtanh.pop %v1009
    %v1026 = vmul.f32 %v1022, %v956
    %1028 = vrot.lane.b32.xlu0 %v1025, 64
    %v1029 = vpop.permute.xlu0 %1028
    %v1031 = vmul.f32 %v1022, %v1029
    %1033 = vrot.lane.b32.xlu0 %v1031, 64
    %v1034 = vpop.permute.xlu0 %1033
    %v1036 = vadd.f32 %v1026, %v1034
    %v1037 = vtanh.pop %v1036
    %1039 = vrot.lane.b32.xlu0 %v1037, 64
    %v1040 = vpop.permute.xlu0 %1039
    %v1042 = vmul.f32 %v1024, %v1040
    %vm1043 = vcmp.eq.s32.totalorder %v517, 6
    %v1044 = vsel %vm1043, %v1042, %v964
    %v1045 = vpack.c.bf16 %v1042, %v1042
    %s1046 = scalar_lea.vmem [#allocation2], 96
    %v1047 = vld [vmem:[%s1046] sm:$0xff]
    %v1048 = vld [vmem:[%s1046 + $0x8] sm:$0xff]
    %v1050 = vsel %vm568, %v1045, 0
    %1052 = vmatprep.subr.bf16.mxu0 %v553
    %1053 = vmatpush1.bf16.msra.mxu0 %v552
    %1054 = vmatprep.subr.bf16.mxu0 %v555
    %1055 = vmatpush1.bf16.msra.mxu0 %v554
    %1056 = vmatprep.subr.bf16.mxu0 %v557
    %1057 = vmatpush1.bf16.msra.mxu0 %v556
    %1058 = vmatprep.subr.bf16.mxu0 %v559
    %1059 = vmatpush1.bf16.msra.mxu0 %v558
    %1060 = vmatprep.subr.bf16.mxu0 0
    %1061 = vmatpush1.bf16.msra.mxu0 0
    %1062 = vmatprep.subr.bf16.mxu0 0
    %1063 = vmatpush1.bf16.msra.mxu0 0
    %1064 = vmatprep.subr.bf16.mxu0 0
    %1065 = vmatpush1.bf16.msra.mxu0 0
    %1066 = vmatprep.subr.bf16.mxu0 0
    %1067 = vmatpush1.bf16.msra.mxu0 0
    %1068 = vmatprep.subr.bf16.mxu0 0
    %1069 = vmatpush1.bf16.msra.mxu0 0
    %1070 = vmatprep.subr.bf16.mxu0 0
    %1071 = vmatpush1.bf16.msra.mxu0 0
    %1072 = vmatprep.subr.bf16.mxu0 0
    %1073 = vmatpush1.bf16.msra.mxu0 0
    %1074 = vmatprep.subr.bf16.mxu0 0
    %1075 = vmatpush1.bf16.msra.mxu0 0
    %1076 = vmatprep.subr.bf16.mxu0 0
    %1077 = vmatpush1.bf16.msra.mxu0 0
    %1078 = vmatprep.subr.bf16.mxu0 0
    %1079 = vmatpush1.bf16.msra.mxu0 0
    %1080 = vmatprep.subr.bf16.mxu0 0
    %1081 = vmatpush1.bf16.msra.mxu0 0
    %1082 = vmatprep.subr.bf16.mxu0 0
    %1083 = vmatpush1.bf16.msra.mxu0 0
    %1084 = vmatprep.mubr.bf16.mxu0 0
    %1085 = vmatmul.mubr.bf16.gmra.mrb[0].mxu0 %v1050
    %v1086 = vpop.f32.mrb[0].mxu0
    %v1087 = vadd.f32 %v1047, %v1086
    %v1088 = vpop.f32.mrb[0].mxu0
    %v1089 = vadd.f32 %v1048, %v1088
    %v1090 = vpop.f32.mrb[0].mxu0
    %v1091 = vpop.f32.mrb[0].mxu0
    %1092 = vdwg.mxu0
    %v1093 = vxor.u32 %v1087, 2147483648
    %v1094 = vxor.u32 %v1089, 2147483648
    %v1095 = vmul.f32 %v1093, 1.442695
    %v1096 = vpow.pop %v1095
    %v1097 = vmul.f32 %v1094, 1.442695
    %v1098 = vpow.pop %v1097
    %v1099 = vadd.f32 %v1096, 1.0
    %v1100 = vadd.f32 %v1098, 1.0
    %v1101 = vrcp.pop %v1099
    %v1102 = vmul.f32 1.0, %v1101
    %v1103 = vrcp.pop %v1100
    %v1104 = vmul.f32 1.0, %v1103
    %v1105 = vtanh.pop %v1089
    %v1106 = vmul.f32 %v1102, %v1036
    %1108 = vrot.lane.b32.xlu0 %v1105, 64
    %v1109 = vpop.permute.xlu0 %1108
    %v1111 = vmul.f32 %v1102, %v1109
    %1113 = vrot.lane.b32.xlu0 %v1111, 64
    %v1114 = vpop.permute.xlu0 %1113
    %v1116 = vadd.f32 %v1106, %v1114
    %v1117 = vtanh.pop %v1116
    %1119 = vrot.lane.b32.xlu0 %v1117, 64
    %v1120 = vpop.permute.xlu0 %1119
    %v1122 = vmul.f32 %v1104, %v1120
    %vm1123 = vcmp.eq.s32.totalorder %v517, 7
    %v1124 = vsel %vm1123, %v1122, %v1044
    %v1125 = vpack.c.bf16 %v1122, %v1122
    %s1126 = scalar_lea.vmem [#allocation2], 112
    %v1127 = vld [vmem:[%s1126] sm:$0xff]
    %v1128 = vld [vmem:[%s1126 + $0x8] sm:$0xff]
    %v1130 = vsel %vm568, %v1125, 0
    %1132 = vmatprep.subr.bf16.mxu0 %v553
    %1133 = vmatpush1.bf16.msra.mxu0 %v552
    %1134 = vmatprep.subr.bf16.mxu0 %v555
    %1135 = vmatpush1.bf16.msra.mxu0 %v554
    %1136 = vmatprep.subr.bf16.mxu0 %v557
    %1137 = vmatpush1.bf16.msra.mxu0 %v556
    %1138 = vmatprep.subr.bf16.mxu0 %v559
    %1139 = vmatpush1.bf16.msra.mxu0 %v558
    %1140 = vmatprep.subr.bf16.mxu0 0
    %1141 = vmatpush1.bf16.msra.mxu0 0
    %1142 = vmatprep.subr.bf16.mxu0 0
    %1143 = vmatpush1.bf16.msra.mxu0 0
    %1144 = vmatprep.subr.bf16.mxu0 0
    %1145 = vmatpush1.bf16.msra.mxu0 0
    %1146 = vmatprep.subr.bf16.mxu0 0
    %1147 = vmatpush1.bf16.msra.mxu0 0
    %1148 = vmatprep.subr.bf16.mxu0 0
    %1149 = vmatpush1.bf16.msra.mxu0 0
    %1150 = vmatprep.subr.bf16.mxu0 0
    %1151 = vmatpush1.bf16.msra.mxu0 0
    %1152 = vmatprep.subr.bf16.mxu0 0
    %1153 = vmatpush1.bf16.msra.mxu0 0
    %1154 = vmatprep.subr.bf16.mxu0 0
    %1155 = vmatpush1.bf16.msra.mxu0 0
    %1156 = vmatprep.subr.bf16.mxu0 0
    %1157 = vmatpush1.bf16.msra.mxu0 0
    %1158 = vmatprep.subr.bf16.mxu0 0
    %1159 = vmatpush1.bf16.msra.mxu0 0
    %1160 = vmatprep.subr.bf16.mxu0 0
    %1161 = vmatpush1.bf16.msra.mxu0 0
    %1162 = vmatprep.subr.bf16.mxu0 0
    %1163 = vmatpush1.bf16.msra.mxu0 0
    %1164 = vmatprep.mubr.bf16.mxu0 0
    %1165 = vmatmul.mubr.bf16.gmra.mrb[0].mxu0 %v1130
    %v1166 = vpop.f32.mrb[0].mxu0
    %v1167 = vadd.f32 %v1127, %v1166
    %v1168 = vpop.f32.mrb[0].mxu0
    %v1169 = vadd.f32 %v1128, %v1168
    %v1170 = vpop.f32.mrb[0].mxu0
    %v1171 = vpop.f32.mrb[0].mxu0
    %1172 = vdwg.mxu0
    %v1173 = vxor.u32 %v1167, 2147483648
    %v1174 = vxor.u32 %v1169, 2147483648
    %v1175 = vmul.f32 %v1173, 1.442695
    %v1176 = vpow.pop %v1175
    %v1177 = vmul.f32 %v1174, 1.442695
    %v1178 = vpow.pop %v1177
    %v1179 = vadd.f32 %v1176, 1.0
    %v1180 = vadd.f32 %v1178, 1.0
    %v1181 = vrcp.pop %v1179
    %v1182 = vmul.f32 1.0, %v1181
    %v1183 = vrcp.pop %v1180
    %v1184 = vmul.f32 1.0, %v1183
    %v1185 = vtanh.pop %v1169
    %v1186 = vmul.f32 %v1182, %v1116
    %1188 = vrot.lane.b32.xlu0 %v1185, 64
    %v1189 = vpop.permute.xlu0 %1188
    %v1191 = vmul.f32 %v1182, %v1189
    %1193 = vrot.lane.b32.xlu0 %v1191, 64
    %v1194 = vpop.permute.xlu0 %1193
    %v1196 = vadd.f32 %v1186, %v1194
    %v1197 = vtanh.pop %v1196
    %1199 = vrot.lane.b32.xlu0 %v1197, 64
    %v1200 = vpop.permute.xlu0 %1199
    %v1202 = vmul.f32 %v1184, %v1200
    %vm1203 = vcmp.eq.s32.totalorder %v517, 8
    %v1204 = vsel %vm1203, %v1202, %v1124
    %v1205 = vpack.c.bf16 %v1202, %v1202
    %s1206 = scalar_lea.vmem [#allocation2], 128
    %v1207 = vld [vmem:[%s1206] sm:$0xff]
    %v1208 = vld [vmem:[%s1206 + $0x8] sm:$0xff]
    %v1210 = vsel %vm568, %v1205, 0
    %1212 = vmatprep.subr.bf16.mxu0 %v553
    %1213 = vmatpush1.bf16.msra.mxu0 %v552
    %1214 = vmatprep.subr.bf16.mxu0 %v555
    %1215 = vmatpush1.bf16.msra.mxu0 %v554
    %1216 = vmatprep.subr.bf16.mxu0 %v557
    %1217 = vmatpush1.bf16.msra.mxu0 %v556
    %1218 = vmatprep.subr.bf16.mxu0 %v559
    %1219 = vmatpush1.bf16.msra.mxu0 %v558
    %1220 = vmatprep.subr.bf16.mxu0 0
    %1221 = vmatpush1.bf16.msra.mxu0 0
    %1222 = vmatprep.subr.bf16.mxu0 0
    %1223 = vmatpush1.bf16.msra.mxu0 0
    %1224 = vmatprep.subr.bf16.mxu0 0
    %1225 = vmatpush1.bf16.msra.mxu0 0
    %1226 = vmatprep.subr.bf16.mxu0 0
    %1227 = vmatpush1.bf16.msra.mxu0 0
    %1228 = vmatprep.subr.bf16.mxu0 0
    %1229 = vmatpush1.bf16.msra.mxu0 0
    %1230 = vmatprep.subr.bf16.mxu0 0
    %1231 = vmatpush1.bf16.msra.mxu0 0
    %1232 = vmatprep.subr.bf16.mxu0 0
    %1233 = vmatpush1.bf16.msra.mxu0 0
    %1234 = vmatprep.subr.bf16.mxu0 0
    %1235 = vmatpush1.bf16.msra.mxu0 0
    %1236 = vmatprep.subr.bf16.mxu0 0
    %1237 = vmatpush1.bf16.msra.mxu0 0
    %1238 = vmatprep.subr.bf16.mxu0 0
    %1239 = vmatpush1.bf16.msra.mxu0 0
    %1240 = vmatprep.subr.bf16.mxu0 0
    %1241 = vmatpush1.bf16.msra.mxu0 0
    %1242 = vmatprep.subr.bf16.mxu0 0
    %1243 = vmatpush1.bf16.msra.mxu0 0
    %1244 = vmatprep.mubr.bf16.mxu0 0
    %1245 = vmatmul.mubr.bf16.gmra.mrb[0].mxu0 %v1210
    %v1246 = vpop.f32.mrb[0].mxu0
    %v1247 = vadd.f32 %v1207, %v1246
    %v1248 = vpop.f32.mrb[0].mxu0
    %v1249 = vadd.f32 %v1208, %v1248
    %v1250 = vpop.f32.mrb[0].mxu0
    %v1251 = vpop.f32.mrb[0].mxu0
    %1252 = vdwg.mxu0
    %v1253 = vxor.u32 %v1247, 2147483648
    %v1254 = vxor.u32 %v1249, 2147483648
    %v1255 = vmul.f32 %v1253, 1.442695
    %v1256 = vpow.pop %v1255
    %v1257 = vmul.f32 %v1254, 1.442695
    %v1258 = vpow.pop %v1257
    %v1259 = vadd.f32 %v1256, 1.0
    %v1260 = vadd.f32 %v1258, 1.0
    %v1261 = vrcp.pop %v1259
    %v1262 = vmul.f32 1.0, %v1261
    %v1263 = vrcp.pop %v1260
    %v1264 = vmul.f32 1.0, %v1263
    %v1265 = vtanh.pop %v1249
    %v1266 = vmul.f32 %v1262, %v1196
    %1268 = vrot.lane.b32.xlu0 %v1265, 64
    %v1269 = vpop.permute.xlu0 %1268
    %v1271 = vmul.f32 %v1262, %v1269
    %1273 = vrot.lane.b32.xlu0 %v1271, 64
    %v1274 = vpop.permute.xlu0 %1273
    %v1276 = vadd.f32 %v1266, %v1274
    %v1277 = vtanh.pop %v1276
    %1279 = vrot.lane.b32.xlu0 %v1277, 64
    %v1280 = vpop.permute.xlu0 %1279
    %v1282 = vmul.f32 %v1264, %v1280
    %vm1283 = vcmp.eq.s32.totalorder %v517, 9
    %v1284 = vsel %vm1283, %v1282, %v1204
    %v1285 = vpack.c.bf16 %v1282, %v1282
    %s1286 = scalar_lea.vmem [#allocation2], 144
    %v1287 = vld [vmem:[%s1286] sm:$0xff]
    %v1288 = vld [vmem:[%s1286 + $0x8] sm:$0xff]
    %v1290 = vsel %vm568, %v1285, 0
    %1292 = vmatprep.subr.bf16.mxu0 %v553
    %1293 = vmatpush1.bf16.msra.mxu0 %v552
    %1294 = vmatprep.subr.bf16.mxu0 %v555
    %1295 = vmatpush1.bf16.msra.mxu0 %v554
    %1296 = vmatprep.subr.bf16.mxu0 %v557
    %1297 = vmatpush1.bf16.msra.mxu0 %v556
    %1298 = vmatprep.subr.bf16.mxu0 %v559
    %1299 = vmatpush1.bf16.msra.mxu0 %v558
    %1300 = vmatprep.subr.bf16.mxu0 0
    %1301 = vmatpush1.bf16.msra.mxu0 0
    %1302 = vmatprep.subr.bf16.mxu0 0
    %1303 = vmatpush1.bf16.msra.mxu0 0
    %1304 = vmatprep.subr.bf16.mxu0 0
    %1305 = vmatpush1.bf16.msra.mxu0 0
    %1306 = vmatprep.subr.bf16.mxu0 0
    %1307 = vmatpush1.bf16.msra.mxu0 0
    %1308 = vmatprep.subr.bf16.mxu0 0
    %1309 = vmatpush1.bf16.msra.mxu0 0
    %1310 = vmatprep.subr.bf16.mxu0 0
    %1311 = vmatpush1.bf16.msra.mxu0 0
    %1312 = vmatprep.subr.bf16.mxu0 0
    %1313 = vmatpush1.bf16.msra.mxu0 0
    %1314 = vmatprep.subr.bf16.mxu0 0
    %1315 = vmatpush1.bf16.msra.mxu0 0
    %1316 = vmatprep.subr.bf16.mxu0 0
    %1317 = vmatpush1.bf16.msra.mxu0 0
    %1318 = vmatprep.subr.bf16.mxu0 0
    %1319 = vmatpush1.bf16.msra.mxu0 0
    %1320 = vmatprep.subr.bf16.mxu0 0
    %1321 = vmatpush1.bf16.msra.mxu0 0
    %1322 = vmatprep.subr.bf16.mxu0 0
    %1323 = vmatpush1.bf16.msra.mxu0 0
    %1324 = vmatprep.mubr.bf16.mxu0 0
    %1325 = vmatmul.mubr.bf16.gmra.mrb[0].mxu0 %v1290
    %v1326 = vpop.f32.mrb[0].mxu0
    %v1327 = vadd.f32 %v1287, %v1326
    %v1328 = vpop.f32.mrb[0].mxu0
    %v1329 = vadd.f32 %v1288, %v1328
    %v1330 = vpop.f32.mrb[0].mxu0
    %v1331 = vpop.f32.mrb[0].mxu0
    %1332 = vdwg.mxu0
    %v1333 = vxor.u32 %v1327, 2147483648
    %v1334 = vxor.u32 %v1329, 2147483648
    %v1335 = vmul.f32 %v1333, 1.442695
    %v1336 = vpow.pop %v1335
    %v1337 = vmul.f32 %v1334, 1.442695
    %v1338 = vpow.pop %v1337
    %v1339 = vadd.f32 %v1336, 1.0
    %v1340 = vadd.f32 %v1338, 1.0
    %v1341 = vrcp.pop %v1339
    %v1342 = vmul.f32 1.0, %v1341
    %v1343 = vrcp.pop %v1340
    %v1344 = vmul.f32 1.0, %v1343
    %v1345 = vtanh.pop %v1329
    %v1346 = vmul.f32 %v1342, %v1276
    %1348 = vrot.lane.b32.xlu0 %v1345, 64
    %v1349 = vpop.permute.xlu0 %1348
    %v1351 = vmul.f32 %v1342, %v1349
    %1353 = vrot.lane.b32.xlu0 %v1351, 64
    %v1354 = vpop.permute.xlu0 %1353
    %v1356 = vadd.f32 %v1346, %v1354
    %v1357 = vtanh.pop %v1356
    %1359 = vrot.lane.b32.xlu0 %v1357, 64
    %v1360 = vpop.permute.xlu0 %1359
    %v1362 = vmul.f32 %v1344, %v1360
    %vm1363 = vcmp.eq.s32.totalorder %v517, 10
    %v1364 = vsel %vm1363, %v1362, %v1284
    %v1365 = vpack.c.bf16 %v1362, %v1362
    %s1366 = scalar_lea.vmem [#allocation2], 160
    %v1367 = vld [vmem:[%s1366] sm:$0xff]
    %v1368 = vld [vmem:[%s1366 + $0x8] sm:$0xff]
    %v1370 = vsel %vm568, %v1365, 0
    %1372 = vmatprep.subr.bf16.mxu0 %v553
    %1373 = vmatpush1.bf16.msra.mxu0 %v552
    %1374 = vmatprep.subr.bf16.mxu0 %v555
    %1375 = vmatpush1.bf16.msra.mxu0 %v554
    %1376 = vmatprep.subr.bf16.mxu0 %v557
    %1377 = vmatpush1.bf16.msra.mxu0 %v556
    %1378 = vmatprep.subr.bf16.mxu0 %v559
    %1379 = vmatpush1.bf16.msra.mxu0 %v558
    %1380 = vmatprep.subr.bf16.mxu0 0
    %1381 = vmatpush1.bf16.msra.mxu0 0
    %1382 = vmatprep.subr.bf16.mxu0 0
    %1383 = vmatpush1.bf16.msra.mxu0 0
    %1384 = vmatprep.subr.bf16.mxu0 0
    %1385 = vmatpush1.bf16.msra.mxu0 0
    %1386 = vmatprep.subr.bf16.mxu0 0
    %1387 = vmatpush1.bf16.msra.mxu0 0
    %1388 = vmatprep.subr.bf16.mxu0 0
    %1389 = vmatpush1.bf16.msra.mxu0 0
    %1390 = vmatprep.subr.bf16.mxu0 0
    %1391 = vmatpush1.bf16.msra.mxu0 0
    %1392 = vmatprep.subr.bf16.mxu0 0
    %1393 = vmatpush1.bf16.msra.mxu0 0
    %1394 = vmatprep.subr.bf16.mxu0 0
    %1395 = vmatpush1.bf16.msra.mxu0 0
    %1396 = vmatprep.subr.bf16.mxu0 0
    %1397 = vmatpush1.bf16.msra.mxu0 0
    %1398 = vmatprep.subr.bf16.mxu0 0
    %1399 = vmatpush1.bf16.msra.mxu0 0
    %1400 = vmatprep.subr.bf16.mxu0 0
    %1401 = vmatpush1.bf16.msra.mxu0 0
    %1402 = vmatprep.subr.bf16.mxu0 0
    %1403 = vmatpush1.bf16.msra.mxu0 0
    %1404 = vmatprep.mubr.bf16.mxu0 0
    %1405 = vmatmul.mubr.bf16.gmra.mrb[0].mxu0 %v1370
    %v1406 = vpop.f32.mrb[0].mxu0
    %v1407 = vadd.f32 %v1367, %v1406
    %v1408 = vpop.f32.mrb[0].mxu0
    %v1409 = vadd.f32 %v1368, %v1408
    %v1410 = vpop.f32.mrb[0].mxu0
    %v1411 = vpop.f32.mrb[0].mxu0
    %1412 = vdwg.mxu0
    %v1413 = vxor.u32 %v1407, 2147483648
    %v1414 = vxor.u32 %v1409, 2147483648
    %v1415 = vmul.f32 %v1413, 1.442695
    %v1416 = vpow.pop %v1415
    %v1417 = vmul.f32 %v1414, 1.442695
    %v1418 = vpow.pop %v1417
    %v1419 = vadd.f32 %v1416, 1.0
    %v1420 = vadd.f32 %v1418, 1.0
    %v1421 = vrcp.pop %v1419
    %v1422 = vmul.f32 1.0, %v1421
    %v1423 = vrcp.pop %v1420
    %v1424 = vmul.f32 1.0, %v1423
    %v1425 = vtanh.pop %v1409
    %v1426 = vmul.f32 %v1422, %v1356
    %1428 = vrot.lane.b32.xlu0 %v1425, 64
    %v1429 = vpop.permute.xlu0 %1428
    %v1431 = vmul.f32 %v1422, %v1429
    %1433 = vrot.lane.b32.xlu0 %v1431, 64
    %v1434 = vpop.permute.xlu0 %1433
    %v1436 = vadd.f32 %v1426, %v1434
    %v1437 = vtanh.pop %v1436
    %1439 = vrot.lane.b32.xlu0 %v1437, 64
    %v1440 = vpop.permute.xlu0 %1439
    %v1442 = vmul.f32 %v1424, %v1440
    %vm1443 = vcmp.eq.s32.totalorder %v517, 11
    %v1444 = vsel %vm1443, %v1442, %v1364
    %v1445 = vpack.c.bf16 %v1442, %v1442
    %s1446 = scalar_lea.vmem [#allocation2], 176
    %v1447 = vld [vmem:[%s1446] sm:$0xff]
    %v1448 = vld [vmem:[%s1446 + $0x8] sm:$0xff]
    %v1450 = vsel %vm568, %v1445, 0
    %1452 = vmatprep.subr.bf16.mxu0 %v553
    %1453 = vmatpush1.bf16.msra.mxu0 %v552
    %1454 = vmatprep.subr.bf16.mxu0 %v555
    %1455 = vmatpush1.bf16.msra.mxu0 %v554
    %1456 = vmatprep.subr.bf16.mxu0 %v557
    %1457 = vmatpush1.bf16.msra.mxu0 %v556
    %1458 = vmatprep.subr.bf16.mxu0 %v559
    %1459 = vmatpush1.bf16.msra.mxu0 %v558
    %1460 = vmatprep.subr.bf16.mxu0 0
    %1461 = vmatpush1.bf16.msra.mxu0 0
    %1462 = vmatprep.subr.bf16.mxu0 0
    %1463 = vmatpush1.bf16.msra.mxu0 0
    %1464 = vmatprep.subr.bf16.mxu0 0
    %1465 = vmatpush1.bf16.msra.mxu0 0
    %1466 = vmatprep.subr.bf16.mxu0 0
    %1467 = vmatpush1.bf16.msra.mxu0 0
    %1468 = vmatprep.subr.bf16.mxu0 0
    %1469 = vmatpush1.bf16.msra.mxu0 0
    %1470 = vmatprep.subr.bf16.mxu0 0
    %1471 = vmatpush1.bf16.msra.mxu0 0
    %1472 = vmatprep.subr.bf16.mxu0 0
    %1473 = vmatpush1.bf16.msra.mxu0 0
    %1474 = vmatprep.subr.bf16.mxu0 0
    %1475 = vmatpush1.bf16.msra.mxu0 0
    %1476 = vmatprep.subr.bf16.mxu0 0
    %1477 = vmatpush1.bf16.msra.mxu0 0
    %1478 = vmatprep.subr.bf16.mxu0 0
    %1479 = vmatpush1.bf16.msra.mxu0 0
    %1480 = vmatprep.subr.bf16.mxu0 0
    %1481 = vmatpush1.bf16.msra.mxu0 0
    %1482 = vmatprep.subr.bf16.mxu0 0
    %1483 = vmatpush1.bf16.msra.mxu0 0
    %1484 = vmatprep.mubr.bf16.mxu0 0
    %1485 = vmatmul.mubr.bf16.gmra.mrb[0].mxu0 %v1450
    %v1486 = vpop.f32.mrb[0].mxu0
    %v1487 = vadd.f32 %v1447, %v1486
    %v1488 = vpop.f32.mrb[0].mxu0
    %v1489 = vadd.f32 %v1448, %v1488
    %v1490 = vpop.f32.mrb[0].mxu0
    %v1491 = vpop.f32.mrb[0].mxu0
    %1492 = vdwg.mxu0
    %v1493 = vxor.u32 %v1487, 2147483648
    %v1494 = vxor.u32 %v1489, 2147483648
    %v1495 = vmul.f32 %v1493, 1.442695
    %v1496 = vpow.pop %v1495
    %v1497 = vmul.f32 %v1494, 1.442695
    %v1498 = vpow.pop %v1497
    %v1499 = vadd.f32 %v1496, 1.0
    %v1500 = vadd.f32 %v1498, 1.0
    %v1501 = vrcp.pop %v1499
    %v1502 = vmul.f32 1.0, %v1501
    %v1503 = vrcp.pop %v1500
    %v1504 = vmul.f32 1.0, %v1503
    %v1505 = vtanh.pop %v1489
    %v1506 = vmul.f32 %v1502, %v1436
    %1508 = vrot.lane.b32.xlu0 %v1505, 64
    %v1509 = vpop.permute.xlu0 %1508
    %v1511 = vmul.f32 %v1502, %v1509
    %1513 = vrot.lane.b32.xlu0 %v1511, 64
    %v1514 = vpop.permute.xlu0 %1513
    %v1516 = vadd.f32 %v1506, %v1514
    %v1517 = vtanh.pop %v1516
    %1519 = vrot.lane.b32.xlu0 %v1517, 64
    %v1520 = vpop.permute.xlu0 %1519
    %v1522 = vmul.f32 %v1504, %v1520
    %vm1523 = vcmp.eq.s32.totalorder %v517, 12
    %v1524 = vsel %vm1523, %v1522, %v1444
    %v1525 = vpack.c.bf16 %v1524, %v1524
    %v1526 = vld [vmem:[#allocation8] sm:$0xf]
    %v1527 = vld [vmem:[#allocation8 + $0x4] sm:$0xf]
    %v1528 = vld [vmem:[#allocation8 + $0x8] sm:$0xf]
    %v1529 = vld [vmem:[#allocation8 + $0xc] sm:$0xf]
    %v1530 = vld [vmem:[#allocation8 + $0x10] sm:$0xf]
    %v1531 = vld [vmem:[#allocation8 + $0x14] sm:$0xf]
    %v1532 = vld [vmem:[#allocation8 + $0x18] sm:$0xf]
    %v1533 = vld [vmem:[#allocation8 + $0x1c] sm:$0xf]
    %v1534 = vld [vmem:[%s6] sm:$0x1]
    %v1536 = vlaneseq
    %v1537 = vshrl.u32 %v1536, 7
    %v1538 = vsub.s32 0, %v1537
    %v1539 = vrot.slane %v1534, %v1538
    %v1549 = vunpack.c.l.b16 %v1526
    %v1550 = vunpack.c.l.b16 %v1527
    %v1551 = vunpack.c.l.b16 %v1528
    %v1552 = vunpack.c.l.b16 %v1529
    %v1553 = vunpack.c.l.b16 %v1530
    %v1554 = vunpack.c.l.b16 %v1531
    %v1555 = vunpack.c.l.b16 %v1532
    %v1556 = vunpack.c.l.b16 %v1533
    %v1557 = vpack.c.b16 %v1550, %v1549
    %v1558 = vpack.c.b16 %v1552, %v1551
    %v1559 = vpack.c.b16 %v1554, %v1553
    %v1560 = vpack.c.b16 %v1556, %v1555
    %v1566 = vsel %vm568, %v1525, 0
    %1568 = vmatprep.subr.bf16.mxu0 0
    %1569 = vmatpush1.bf16.msra.mxu0 %v1557
    %1570 = vmatprep.subr.bf16.mxu0 0
    %1571 = vmatpush1.bf16.msra.mxu0 %v1558
    %1572 = vmatprep.subr.bf16.mxu0 0
    %1573 = vmatpush1.bf16.msra.mxu0 %v1559
    %1574 = vmatprep.subr.bf16.mxu0 0
    %1575 = vmatpush1.bf16.msra.mxu0 %v1560
    %1576 = vmatprep.subr.bf16.mxu0 0
    %1577 = vmatpush1.bf16.msra.mxu0 0
    %1578 = vmatprep.subr.bf16.mxu0 0
    %1579 = vmatpush1.bf16.msra.mxu0 0
    %1580 = vmatprep.subr.bf16.mxu0 0
    %1581 = vmatpush1.bf16.msra.mxu0 0
    %1582 = vmatprep.subr.bf16.mxu0 0
    %1583 = vmatpush1.bf16.msra.mxu0 0
    %1584 = vmatprep.subr.bf16.mxu0 0
    %1585 = vmatpush1.bf16.msra.mxu0 0
    %1586 = vmatprep.subr.bf16.mxu0 0
    %1587 = vmatpush1.bf16.msra.mxu0 0
    %1588 = vmatprep.subr.bf16.mxu0 0
    %1589 = vmatpush1.bf16.msra.mxu0 0
    %1590 = vmatprep.subr.bf16.mxu0 0
    %1591 = vmatpush1.bf16.msra.mxu0 0
    %1592 = vmatprep.subr.bf16.mxu0 0
    %1593 = vmatpush1.bf16.msra.mxu0 0
    %1594 = vmatprep.subr.bf16.mxu0 0
    %1595 = vmatpush1.bf16.msra.mxu0 0
    %1596 = vmatprep.subr.bf16.mxu0 0
    %1597 = vmatpush1.bf16.msra.mxu0 0
    %1598 = vmatprep.subr.bf16.mxu0 0
    %1599 = vmatpush1.bf16.msra.mxu0 0
    %1600 = vmatprep.mubr.bf16.mxu0 0
    %1601 = vmatmul.mubr.bf16.gmra.mrb[0].mxu0 %v1566
    %v1602 = vpop.f32.mrb[0].mxu0
    %v1603 = vadd.f32 %v1539, %v1602
    %v1604 = vpop.f32.mrb[0].mxu0
    %v1605 = vpop.f32.mrb[0].mxu0
    %v1606 = vpop.f32.mrb[0].mxu0
    %1607 = vdwg.mxu0
    %vm1608 = vcmp.ge.f32.partialorder %v1603, 0.0
    %v1609 = vmul.f32 %v1603, 0.01
    %v1610 = vsel %vm1608, %v1603, %v1609
    %v1611 = vpack.c.bf16 %v1610, %v1610
    %v1612 = vld [vmem:[%s7] sm:$0xf]
    %v1613 = vld [vmem:[%s7 + $0x4] sm:$0xf]
    %v1614 = vld [vmem:[%s7 + $0x8] sm:$0xf]
    %v1615 = vld [vmem:[%s7 + $0xc] sm:$0xf]
    %v1616 = vld [vmem:[%s7 + $0x10] sm:$0xf]
    %v1617 = vld [vmem:[%s7 + $0x14] sm:$0xf]
    %v1618 = vld [vmem:[%s7 + $0x18] sm:$0xf]
    %v1619 = vld [vmem:[%s7 + $0x1c] sm:$0xf]
    %v1620 = vld [vmem:[%s7 + $0x20] sm:$0xf]
    %v1621 = vld [vmem:[%s7 + $0x24] sm:$0xf]
    %v1622 = vld [vmem:[%s7 + $0x28] sm:$0xf]
    %v1623 = vld [vmem:[%s7 + $0x2c] sm:$0xf]
    %v1624 = vld [vmem:[%s7 + $0x30] sm:$0xf]
    %v1625 = vld [vmem:[%s7 + $0x34] sm:$0xf]
    %v1626 = vld [vmem:[%s7 + $0x38] sm:$0xf]
    %v1627 = vld [vmem:[%s7 + $0x3c] sm:$0xf]
    %v1628 = vld [vmem:[%s8] sm:$0x1]
    %v1630 = vlaneseq
    %v1631 = vshrl.u32 %v1630, 7
    %v1632 = vsub.s32 0, %v1631
    %v1633 = vrot.slane %v1628, %v1632
    %v1651 = vunpack.c.l.b16 %v1612
    %v1652 = vunpack.c.l.b16 %v1613
    %v1653 = vunpack.c.l.b16 %v1614
    %v1654 = vunpack.c.l.b16 %v1615
    %v1655 = vunpack.c.l.b16 %v1616
    %v1656 = vunpack.c.l.b16 %v1617
    %v1657 = vunpack.c.l.b16 %v1618
    %v1658 = vunpack.c.l.b16 %v1619
    %v1659 = vunpack.c.l.b16 %v1620
    %v1660 = vunpack.c.l.b16 %v1621
    %v1661 = vunpack.c.l.b16 %v1622
    %v1662 = vunpack.c.l.b16 %v1623
    %v1663 = vunpack.c.l.b16 %v1624
    %v1664 = vunpack.c.l.b16 %v1625
    %v1665 = vunpack.c.l.b16 %v1626
    %v1666 = vunpack.c.l.b16 %v1627
    %v1667 = vpack.c.b16 %v1652, %v1651
    %v1668 = vpack.c.b16 %v1654, %v1653
    %v1669 = vpack.c.b16 %v1656, %v1655
    %v1670 = vpack.c.b16 %v1658, %v1657
    %v1671 = vpack.c.b16 %v1660, %v1659
    %v1672 = vpack.c.b16 %v1662, %v1661
    %v1673 = vpack.c.b16 %v1664, %v1663
    %v1674 = vpack.c.b16 %v1666, %v1665
    %1683 = vmatprep.subr.bf16.mxu0 0
    %1684 = vmatpush1.bf16.msra.mxu0 %v1667
    %1685 = vmatprep.subr.bf16.mxu0 0
    %1686 = vmatpush1.bf16.msra.mxu0 %v1668
    %1687 = vmatprep.subr.bf16.mxu0 0
    %1688 = vmatpush1.bf16.msra.mxu0 %v1669
    %1689 = vmatprep.subr.bf16.mxu0 0
    %1690 = vmatpush1.bf16.msra.mxu0 %v1670
    %1691 = vmatprep.subr.bf16.mxu0 0
    %1692 = vmatpush1.bf16.msra.mxu0 %v1671
    %1693 = vmatprep.subr.bf16.mxu0 0
    %1694 = vmatpush1.bf16.msra.mxu0 %v1672
    %1695 = vmatprep.subr.bf16.mxu0 0
    %1696 = vmatpush1.bf16.msra.mxu0 %v1673
    %1697 = vmatprep.subr.bf16.mxu0 0
    %1698 = vmatpush1.bf16.msra.mxu0 %v1674
    %1699 = vmatprep.subr.bf16.mxu0 0
    %1700 = vmatpush1.bf16.msra.mxu0 0
    %1701 = vmatprep.subr.bf16.mxu0 0
    %1702 = vmatpush1.bf16.msra.mxu0 0
    %1703 = vmatprep.subr.bf16.mxu0 0
    %1704 = vmatpush1.bf16.msra.mxu0 0
    %1705 = vmatprep.subr.bf16.mxu0 0
    %1706 = vmatpush1.bf16.msra.mxu0 0
    %1707 = vmatprep.subr.bf16.mxu0 0
    %1708 = vmatpush1.bf16.msra.mxu0 0
    %1709 = vmatprep.subr.bf16.mxu0 0
    %1710 = vmatpush1.bf16.msra.mxu0 0
    %1711 = vmatprep.subr.bf16.mxu0 0
    %1712 = vmatpush1.bf16.msra.mxu0 0
    %1713 = vmatprep.subr.bf16.mxu0 0
    %1714 = vmatpush1.bf16.msra.mxu0 0
    %1715 = vmatprep.mubr.bf16.mxu0 0
    %1716 = vmatmul.mubr.bf16.gmra.mrb[0].mxu0 %v1611
    %v1717 = vpop.f32.mrb[0].mxu0
    %v1718 = vadd.f32 %v1633, %v1717
    %v1719 = vpop.f32.mrb[0].mxu0
    %v1720 = vpop.f32.mrb[0].mxu0
    %v1721 = vpop.f32.mrb[0].mxu0
    %1722 = vdwg.mxu0
    %v1723 = vxor.u32 %v1718, 2147483648
    %v1724 = vmul.f32 %v1723, 1.442695
    %v1725 = vpow.pop %v1724
    %v1726 = vadd.f32 %v1725, 1.0
    %v1727 = vrcp.pop %v1726
    %v1728 = vmul.f32 1.0, %v1727
    %1729 = vst [vmem:[#allocation9] sm:$0xff] %v1728
    // Predicated region
    $region50: #{tpu_custom_call.1} parent=1 // pred_check
      _
    $region51: #{tpu_custom_call.1} parent=1 // pred_check_branch
      %1731 = sbr.rel (0) target = $region53
    $region52: #{tpu_custom_call.1} parent=1 // pred_region
      %s1733 = ssub.s32 128, 128
      %1734 = vsyncadd [#allocation5], %s1733
      %s1736 = sshll.u32 [#allocation9], 4
      %s1737 = int_to_ptr.vmem [resolvable:$true] %s1736
      %1739 = dma.vmem_to_hbm [thread:$0]  %s1737, 128, %s9, [#allocation5]
    $region53: #{tpu_custom_call.1} parent=1 // pred_fallthru
      _
    // Predicated region
    $region54: #{tpu_custom_call.1} parent=1 // pred_check
      _
    $region55: #{tpu_custom_call.1} parent=1 // pred_check_branch
      %1741 = sbr.rel (0) target = $region57
    $region56: #{tpu_custom_call.1} parent=1 // pred_region
      %1742 = dma.done [#allocation5], 128
    $region57: #{tpu_custom_call.1} parent=1 // pred_fallthru
      _
    %1743 = vsyncpa [#allocation4], 1
    %1744 = vsyncpa [#allocation7], 1
    %1745 = vsyncpa [#allocation5], 1

</llo_original>
